<compile_context>
chip_gen: v7x
topology: tpu7x:2x2x1
jax: 0.10.0
libtpu: 0.0.40
codegen_flags: <defaults>
</compile_context>

<pallas_src>
import functools

import jax
import jax.numpy as jnp
from jax import lax
from jax.experimental import pallas as pl
from jax.experimental.pallas import tpu as pltpu

LANES = 128          # lane width / padded fc output width
GROUP = 32           # lanes per pool-offset group in the conv dots (>= out chans)
CONV1_OUT = 6
CONV2_OUT = 16
N_PIX = 25           # 5x5 pooled pixels after conv2


# ---------------------------------------------------------------------------
# Pallas kernels
# ---------------------------------------------------------------------------
def _conv1_kernel(p_ref, w_ref, b_ref, o_ref, *, images_per_block, group):
    """Fused conv1 + bias + ReLU + 2x2/2 max-pool for `images_per_block` images.

    p_ref: (ib, 196, K1) bf16   patches on the pooled grid (6x6 window, stride 2)
    w_ref: (K1, 4*group) bf16   conv weight embedded at the 4 pool offsets,
                                stacked along N (group lanes per offset)
    b_ref: (1, group)    f32
    o_ref: (ib, 196, group) bf16
    """
    w = w_ref[...]
    b = b_ref[...]
    for j in range(images_per_block):
        acc = jnp.dot(p_ref[j], w, preferred_element_type=jnp.float32)  # (196, 4*group)
        m = acc[:, :group]
        for q in range(1, 4):
            m = jnp.maximum(m, acc[:, q * group:(q + 1) * group])
        # bias is identical across the 4 pool positions and ReLU is monotone, so
        # bias+ReLU after the max == pool(relu(conv + bias)).
        o_ref[j] = jnp.maximum(m + b, 0.0).astype(o_ref.dtype)


def _conv2_fc_kernel(p_ref, wc_ref, bc_ref, w1_ref, b1_ref, w2_ref, b2_ref,
                     w3_ref, b3_ref, o_ref, xf_ref, *, bb, n_pix, group, real_c):
    """conv2+bias+ReLU+pool fused with fc1->relu->fc2->relu->fc3.

    p_ref : (1, n_pix*bb, K2) bf16  conv2 patches, rows ordered pix*bb + image
    wc_ref: (K2, 4*group)     bf16  conv2 weight, 4 pool offsets along N
    bc_ref: (1, group)        f32
    w*_ref / b*_ref: packed fc weights (bf16) / biases (f32)
    o_ref : (1, bb, 128)      f32   logits (padded to 128 lanes)
    xf_ref: (bb, n_pix*real_c) f32  VMEM scratch: compact fc1 input (25*16=400)
    """
    # ---- conv2 + bias + ReLU + pool: one dot, VPU max over 4 offset groups --
    acc = jnp.dot(p_ref[0], wc_ref[...], preferred_element_type=jnp.float32)
    m = acc[:, :group]
    for q in range(1, 4):
        m = jnp.maximum(m, acc[:, q * group:(q + 1) * group])
    y2 = jnp.maximum(m + bc_ref[...], 0.0)              # (n_pix*bb, group) f32

    # ---- relayout: (pixel-major rows, 16 real channels) -> (bb, 400) --------
    # 25 small static-slice stores into VMEM scratch; the compacted layout is
    # what lets fc1_w be 400x128 instead of 3200x128.
    for pix in range(n_pix):
        xf_ref[:, pix * real_c:(pix + 1) * real_c] = (
            y2[pix * bb:(pix + 1) * bb, :real_c])

    # ---- fc1 -> relu -> fc2 -> relu -> fc3, everything stays on-chip --------
    h = jnp.dot(xf_ref[...].astype(jnp.bfloat16), w1_ref[...],
                preferred_element_type=jnp.float32)
    h = jnp.maximum(h + b1_ref[...], 0.0)
    h = jnp.dot(h.astype(jnp.bfloat16), w2_ref[...],
                preferred_element_type=jnp.float32)
    h = jnp.maximum(h + b2_ref[...], 0.0)
    o_ref[0] = jnp.dot(h.astype(jnp.bfloat16), w3_ref[...],
                       preferred_element_type=jnp.float32) + b3_ref[...]


# ---------------------------------------------------------------------------
# pallas_call wrappers
# ---------------------------------------------------------------------------
def _images_per_block(batch):
    """Largest divisor of `batch` giving >=2 grid steps when batch >= 2 (so both
    v7x TensorCores get work) while bounding per-step VMEM for large batches."""
    cap = max(1, min(16, batch // 2))
    for d in range(cap, 0, -1):
        if batch % d == 0:
            return d
    return 1


def conv1_pool_call(p1, w_emb, b_emb, *, images_per_block):
    B, M, K = p1.shape
    ib = images_per_block
    assert B % ib == 0
    nb = B // ib
    Kw, N = w_emb.shape
    group = b_emb.shape[1]
    assert Kw == K and N == 4 * group

    kernel = functools.partial(_conv1_kernel, images_per_block=ib, group=group)
    flops = 2 * B * M * K * N
    bytes_accessed = (p1.size * 2 + w_emb.size * 2 + b_emb.size * 4
                      + B * M * group * 2)

    return pl.pallas_call(
        kernel,
        out_shape=jax.ShapeDtypeStruct((B, M, group), jnp.bfloat16),
        grid=(nb,),
        in_specs=[
            pl.BlockSpec((ib, M, K), lambda i: (i, 0, 0)),
            pl.BlockSpec((Kw, N), lambda i: (0, 0)),        # resident weights
            pl.BlockSpec((1, group), lambda i: (0, 0)),
        ],
        out_specs=pl.BlockSpec((ib, M, group), lambda i: (i, 0, 0)),
        compiler_params=pltpu.CompilerParams(dimension_semantics=("parallel",)),
        cost_estimate=pl.CostEstimate(flops=flops, transcendentals=0,
                                      bytes_accessed=bytes_accessed),
    )(p1, w_emb, b_emb)


def conv2_fc_call(p2, wc, bc, w1, b1, w2, b2, w3, b3, *, images_per_block, n_pix):
    nb, rows, K = p2.shape
    bb = images_per_block
    assert rows == n_pix * bb
    group = bc.shape[1]
    B = nb * bb

    kernel = functools.partial(_conv2_fc_kernel, bb=bb, n_pix=n_pix,
                               group=group, real_c=CONV2_OUT)
    flops = (2 * B * n_pix * K * (4 * group)
             + 2 * B * (w1.shape[0] * w1.shape[1]
                        + w2.shape[0] * w2.shape[1]
                        + w3.shape[0] * w3.shape[1]))
    weight_bytes = sum(a.size * 2 for a in (wc, w1, w2, w3)) + \
        sum(a.size * 4 for a in (bc, b1, b2, b3))
    bytes_accessed = p2.size * 2 + weight_bytes + B * LANES * 4

    return pl.pallas_call(
        kernel,
        out_shape=jax.ShapeDtypeStruct((nb, bb, LANES), jnp.float32),
        grid=(nb,),
        in_specs=[
            pl.BlockSpec((1, rows, K), lambda i: (i, 0, 0)),
            pl.BlockSpec(wc.shape, lambda i: (0, 0)),
            pl.BlockSpec(bc.shape, lambda i: (0, 0)),
            pl.BlockSpec(w1.shape, lambda i: (0, 0)),
            pl.BlockSpec(b1.shape, lambda i: (0, 0)),
            pl.BlockSpec(w2.shape, lambda i: (0, 0)),
            pl.BlockSpec(b2.shape, lambda i: (0, 0)),
            pl.BlockSpec(w3.shape, lambda i: (0, 0)),
            pl.BlockSpec(b3.shape, lambda i: (0, 0)),
        ],
        out_specs=pl.BlockSpec((1, bb, LANES), lambda i: (i, 0, 0)),
        scratch_shapes=[pltpu.VMEM((bb, n_pix * CONV2_OUT), jnp.float32)],
        compiler_params=pltpu.CompilerParams(dimension_semantics=("parallel",)),
        cost_estimate=pl.CostEstimate(flops=flops, transcendentals=0,
                                      bytes_accessed=bytes_accessed),
    )(p2, wc, bc, w1, b1, w2, b2, w3, b3)


# ---------------------------------------------------------------------------
# One-time parameter packing (reshape / transpose / pad / bf16 cast, all
# hoisted out of the forward pass).
# ---------------------------------------------------------------------------
def _pack_conv(w, b, group):
    """(O,C,5,5) PyTorch conv weight -> (C*36, 4*group) bf16.

    Patch feature index (from conv_general_dilated_patches) is c*36 + ii*6 + jj;
    the conv output at pool offset (di,dj) reads window position (di+ki, dj+kj),
    so w[o,c,ki,kj] is embedded there; the 4 pool offsets are stacked along N
    in groups of `group` lanes (real channels first, rest zero)."""
    O, C, kh, kw = w.shape
    assert O <= group
    wh, ww = kh + 1, kw + 1
    w_t = jnp.transpose(w, (1, 2, 3, 0)).astype(jnp.float32)        # (C, kh, kw, O)
    emb = jnp.zeros((4, C, wh, ww, O), jnp.float32)
    for di in range(2):
        for dj in range(2):
            emb = emb.at[di * 2 + dj, :, di:di + kh, dj:dj + kw, :].set(w_t)
    emb = emb.reshape(4, C * wh * ww, O)                             # (4, K, O)
    K = C * wh * ww
    w_pack = jnp.zeros((K, 4 * group), jnp.float32)
    for q in range(4):
        w_pack = w_pack.at[:, q * group:q * group + O].set(emb[q])
    b_pack = jnp.zeros((1, group), jnp.float32).at[0, :O].set(b.astype(jnp.float32))
    return w_pack.astype(jnp.bfloat16), b_pack


def _pack_fc1(w, b, n_pix, real_c):
    """PyTorch fc1 (120, 16*5*5) expecting NCHW-flatten order (c*25 + pix) ->
    compact (n_pix*real_c, 128) bf16 whose rows match the in-kernel packed
    layout (pix*16 + c).  No zero-padding rows: 400 real rows only."""
    O, I = w.shape
    assert I == n_pix * real_c and O <= LANES
    w_r = w.reshape(O, real_c, n_pix).astype(jnp.float32)            # (O, c, pix)
    w_r = jnp.transpose(w_r, (2, 1, 0)).reshape(n_pix * real_c, O)   # row = pix*16+c
    w_pack = jnp.zeros((n_pix * real_c, LANES), jnp.float32).at[:, :O].set(w_r)
    b_pack = jnp.zeros((1, LANES), jnp.float32).at[0, :O].set(b.astype(jnp.float32))
    return w_pack.astype(jnp.bfloat16), b_pack


def _pack_fc(w, b):
    """PyTorch (out, in) fc weight -> (128, 128) lane-padded (in, out) bf16."""
    O, I = w.shape
    assert O <= LANES and I <= LANES
    w_pack = jnp.zeros((LANES, LANES), jnp.float32).at[:I, :O].set(
        w.T.astype(jnp.float32))
    b_pack = jnp.zeros((1, LANES), jnp.float32).at[0, :O].set(b.astype(jnp.float32))
    return w_pack.astype(jnp.bfloat16), b_pack


def pack_params(raw):
    c1w, c1b = _pack_conv(raw["conv1_w"], raw["conv1_b"], GROUP)
    c2w, c2b = _pack_conv(raw["conv2_w"], raw["conv2_b"], GROUP)
    f1w, f1b = _pack_fc1(raw["fc1_w"], raw["fc1_b"], N_PIX, CONV2_OUT)
    f2w, f2b = _pack_fc(raw["fc2_w"], raw["fc2_b"])
    f3w, f3b = _pack_fc(raw["fc3_w"], raw["fc3_b"])
    return dict(c1_w=c1w, c1_b=c1b, c2_w=c2w, c2_b=c2b,
                fc1_w=f1w, fc1_b=f1b, fc2_w=f2w, fc2_b=f2b,
                fc3_w=f3w, fc3_b=f3b)


# ---------------------------------------------------------------------------
# Forward pass
# ---------------------------------------------------------------------------
def net_forward(packed, x_nchw, *, num_classes):
    B, C, H, W = x_nchw.shape                                  # (B, 3, 32, 32)
    H1, W1 = (H - 6) // 2 + 1, (W - 6) // 2 + 1                # 14, 14
    H2, W2 = (H1 - 6) // 2 + 1, (W1 - 6) // 2 + 1              # 5, 5
    assert H2 * W2 == N_PIX

    # --- conv1 + relu + pool (one fused Pallas kernel) -----------------------
    # Patch extraction on the pooled grid: 6x6 windows, stride 2 (receptive
    # field of one pooled pixel); done once in XLA, fused into the HLO.
    p1 = lax.conv_general_dilated_patches(
        x_nchw.astype(jnp.float32), (6, 6), (2, 2), "VALID",
        dimension_numbers=("NCHW", "OIHW", "NHWC"))            # (B, 14, 14, C*36)
    p1 = p1.reshape(B, H1 * W1, C * 36).astype(jnp.bfloat16)

    ib1 = _images_per_block(B)
    y1 = conv1_pool_call(p1, packed["c1_w"], packed["c1_b"],
                         images_per_block=ib1)                 # (B, 196, 32) bf16
    x1 = y1.reshape(B, H1, W1, GROUP)[..., :CONV1_OUT]         # (B, 14, 14, 6) NHWC

    # --- conv2 + relu + pool + fc1 -> relu -> fc2 -> relu -> fc3 (one kernel) -
    p2 = lax.conv_general_dilated_patches(
        x1, (6, 6), (2, 2), "VALID",
        dimension_numbers=("NHWC", "HWIO", "NHWC"))            # (B, 5, 5, 216)
    bb = _images_per_block(B)
    nb = B // bb
    # rows ordered pix*bb + image within each chunk so the in-kernel repack
    # uses contiguous sublane slices.
    p2 = p2.reshape(nb, bb, N_PIX, CONV1_OUT * 36)
    p2 = jnp.transpose(p2, (0, 2, 1, 3)).reshape(nb, N_PIX * bb, CONV1_OUT * 36)

    out = conv2_fc_call(p2, packed["c2_w"], packed["c2_b"],
                        packed["fc1_w"], packed["fc1_b"],
                        packed["fc2_w"], packed["fc2_b"],
                        packed["fc3_w"], packed["fc3_b"],
                        images_per_block=bb, n_pix=N_PIX)      # (nb, bb, 128) f32
    return out.reshape(B, LANES)[:, :num_classes]


# ---------------------------------------------------------------------------
# Raw (PyTorch-layout) params and a pure-JAX reference for validation
# ---------------------------------------------------------------------------
def init_raw_params(key, num_classes):
    ks = jax.random.split(key, 10)

    def rnd(k, shape, scale):
        return jax.random.normal(k, shape, jnp.float32) * scale

    return {
        "conv1_w": rnd(ks[0], (6, 3, 5, 5), 0.1),
        "conv1_b": rnd(ks[1], (6,), 0.1),
        "conv2_w": rnd(ks[2], (16, 6, 5, 5), 0.1),
        "conv2_b": rnd(ks[3], (16,), 0.1),
        "fc1_w": rnd(ks[4], (120, 16 * 5 * 5), 0.05),          # PyTorch (out, in)
        "fc1_b": rnd(ks[5], (120,), 0.05),
        "fc2_w": rnd(ks[6], (84, 120), 0.05),
        "fc2_b": rnd(ks[7], (84,), 0.05),
        "fc3_w": rnd(ks[8], (num_classes, 84), 0.05),
        "fc3_b": rnd(ks[9], (num_classes,), 0.05),
    }


def reference_forward(raw, x):
    hp = lax.Precision.HIGHEST
    y = lax.conv_general_dilated(x, raw["conv1_w"], (1, 1), "VALID",
                                 dimension_numbers=("NCHW", "OIHW", "NCHW"),
                                 precision=hp)
    y = jnp.maximum(y + raw["conv1_b"].reshape(1, -1, 1, 1), 0.0)
    y = lax.reduce_window(y, -jnp.inf, lax.max, (1, 1, 2, 2), (1, 1, 2, 2), "VALID")
    y = lax.conv_general_dilated(y, raw["conv2_w"], (1, 1), "VALID",
                                 dimension_numbers=("NCHW", "OIHW", "NCHW"),
                                 precision=hp)
    y = jnp.maximum(y + raw["conv2_b"].reshape(1, -1, 1, 1), 0.0)
    y = lax.reduce_window(y, -jnp.inf, lax.max, (1, 1, 2, 2), (1, 1, 2, 2), "VALID")
    y = y.reshape(x.shape[0], -1)                              # NCHW flatten
    y = jnp.maximum(jnp.dot(y, raw["fc1_w"].T, precision=hp) + raw["fc1_b"], 0.0)
    y = jnp.maximum(jnp.dot(y, raw["fc2_w"].T, precision=hp) + raw["fc2_b"], 0.0)
    return jnp.dot(y, raw["fc3_w"].T, precision=hp) + raw["fc3_b"]


if __name__ == "__main__":
    num_classes = 10
    batch = 2

    # 3x32x32 input so two (conv5 + pool2) stages give 16x5x5 = fc1's input.
    x = jax.random.normal(jax.random.PRNGKey(0), (batch, 3, 32, 32), jnp.float32)
    raw = init_raw_params(jax.random.PRNGKey(42), num_classes)
    packed = pack_params(raw)                                  # one-time weight packing

    forward = jax.jit(functools.partial(net_forward, num_classes=num_classes))
    out = jax.block_until_ready(forward(packed, x))

    assert out.shape == (batch, num_classes), out.shape
    assert bool(jnp.all(jnp.isfinite(out)))

    # Cross-check the fused Pallas pipeline (incl. patch-layout assumptions)
    # against a pure-JAX high-precision reference.
    ref = jax.block_until_ready(jax.jit(reference_forward)(raw, x))
    max_err = float(jnp.max(jnp.abs(out - ref)))
    assert jnp.allclose(out, ref, rtol=2e-2, atol=2e-2), f"max_err={max_err}"

    print("KERNEL_OK")
</pallas_src>

<mosaic_0001>
module attributes {stable_mosaic.version = 11 : i64} {
  func.func @_conv1_kernel(%arg0: i32, %arg1: memref<1x196x108xbf16, #tpu.memory_space<vmem>>, %arg2: memref<108x128xbf16, #tpu.memory_space<vmem>>, %arg3: memref<1x32xf32, #tpu.memory_space<vmem>>, %arg4: memref<1x196x32xbf16, #tpu.memory_space<vmem>>) attributes {dimension_semantics = [#tpu.dimension_semantics<parallel>], iteration_bounds = array<i64: 2>, scalar_prefetch = 0 : i64, scratch_operands = 0 : i64, tpu.core_type = #tpu.core_type<tc>, window_params = [{transform_indices = @transform_0, window_bounds = array<i64: 1, 196, 108>}, {pipeline_mode = #tpu.pipeline_mode<synchronous>, transform_indices = @transform_1, window_bounds = array<i64: 108, 128>}, {pipeline_mode = #tpu.pipeline_mode<synchronous>, transform_indices = @transform_2, window_bounds = array<i64: 1, 32>}, {transform_indices = @transform_3, window_bounds = array<i64: 1, 196, 32>}]} {
    %c0 = arith.constant 0 : index
    %c0_0 = arith.constant 0 : index
    %0 = vector.load %arg2[%c0, %c0_0] : memref<108x128xbf16, #tpu.memory_space<vmem>>, vector<108x128xbf16>
    %c0_1 = arith.constant 0 : index
    %c0_2 = arith.constant 0 : index
    %1 = vector.load %arg3[%c0_1, %c0_2] : memref<1x32xf32, #tpu.memory_space<vmem>>, vector<1x32xf32>
    %c0_3 = arith.constant 0 : index
    %c0_4 = arith.constant 0 : index
    %c0_5 = arith.constant 0 : index
    %2 = vector.load %arg1[%c0_3, %c0_4, %c0_5] : memref<1x196x108xbf16, #tpu.memory_space<vmem>>, vector<1x196x108xbf16>
    %3 = vector.shape_cast %2 : vector<1x196x108xbf16> to vector<196x108xbf16>
    %cst = arith.constant dense<0.000000e+00> : vector<196x128xf32>
    %4 = tpu.matmul %3, %0, %cst {dimension_numbers = #tpu.dot_dimension_numbers<[1], [0], [0], [1], [0, 0, 1, 1], [], []>} : vector<196x108xbf16>, vector<108x128xbf16>, vector<196x128xf32> -> vector<196x128xf32>
    %5 = vector.extract_strided_slice %4 {offsets = [0, 0], sizes = [196, 32], strides = [1, 1]} : vector<196x128xf32> to vector<196x32xf32>
    %6 = vector.extract_strided_slice %4 {offsets = [0, 32], sizes = [196, 32], strides = [1, 1]} : vector<196x128xf32> to vector<196x32xf32>
    %7 = arith.maximumf %5, %6 : vector<196x32xf32>
    %8 = vector.extract_strided_slice %4 {offsets = [0, 64], sizes = [196, 32], strides = [1, 1]} : vector<196x128xf32> to vector<196x32xf32>
    %9 = arith.maximumf %7, %8 : vector<196x32xf32>
    %10 = vector.extract_strided_slice %4 {offsets = [0, 96], sizes = [196, 32], strides = [1, 1]} : vector<196x128xf32> to vector<196x32xf32>
    %11 = arith.maximumf %9, %10 : vector<196x32xf32>
    %12 = vector.broadcast %1 : vector<1x32xf32> to vector<196x32xf32>
    %13 = arith.addf %11, %12 : vector<196x32xf32>
    %cst_6 = arith.constant 0.000000e+00 : f32
    %14 = vector.broadcast %cst_6 : f32 to vector<196x32xf32>
    %15 = arith.maximumf %13, %14 : vector<196x32xf32>
    %16 = arith.truncf %15 : vector<196x32xf32> to vector<196x32xbf16>
    %c0_7 = arith.constant 0 : index
    %c0_8 = arith.constant 0 : index
    %c0_9 = arith.constant 0 : index
    %17 = vector.load %arg4[%c0_7, %c0_8, %c0_9] : memref<1x196x32xbf16, #tpu.memory_space<vmem>>, vector<1x196x32xbf16>
    %18 = vector.shape_cast %17 : vector<1x196x32xbf16> to vector<196x32xbf16>
    %19 = vector.shape_cast %16 : vector<196x32xbf16> to vector<1x196x32xbf16>
    tpu.vector_store %arg4[%c0_7, %c0_8, %c0_9], %19 {strides = array<i32>} : memref<1x196x32xbf16, #tpu.memory_space<vmem>>, vector<1x196x32xbf16>,
    return
  }
  func.func @transform_0(%arg0: i32) -> (i32, i32, i32) {
    %c0_i32 = arith.constant 0 : i32
    %c0_i32_0 = arith.constant 0 : i32
    %c0_i32_1 = arith.constant 0 : i32
    return %arg0, %c0_i32, %c0_i32_0 : i32, i32, i32
  }
  func.func @transform_1(%arg0: i32) -> (i32, i32) {
    %c0_i32 = arith.constant 0 : i32
    %c0_i32_0 = arith.constant 0 : i32
    %c0_i32_1 = arith.constant 0 : i32
    return %c0_i32, %c0_i32_0 : i32, i32
  }
  func.func @transform_2(%arg0: i32) -> (i32, i32) {
    %c0_i32 = arith.constant 0 : i32
    %c0_i32_0 = arith.constant 0 : i32
    %c0_i32_1 = arith.constant 0 : i32
    return %c0_i32, %c0_i32_0 : i32, i32
  }
  func.func @transform_3(%arg0: i32) -> (i32, i32, i32) {
    %c0_i32 = arith.constant 0 : i32
    %c0_i32_0 = arith.constant 0 : i32
    %c0_i32_1 = arith.constant 0 : i32
    return %arg0, %c0_i32, %c0_i32_0 : i32, i32, i32
  }
}

module attributes {stable_mosaic.version = 11 : i64} {
  func.func @_conv2_fc_kernel(%arg0: i32, %arg1: memref<1x25x216xbf16, #tpu.memory_space<vmem>>, %arg2: memref<216x128xbf16, #tpu.memory_space<vmem>>, %arg3: memref<1x32xf32, #tpu.memory_space<vmem>>, %arg4: memref<400x128xbf16, #tpu.memory_space<vmem>>, %arg5: memref<1x128xf32, #tpu.memory_space<vmem>>, %arg6: memref<128x128xbf16, #tpu.memory_space<vmem>>, %arg7: memref<1x128xf32, #tpu.memory_space<vmem>>, %arg8: memref<128x128xbf16, #tpu.memory_space<vmem>>, %arg9: memref<1x128xf32, #tpu.memory_space<vmem>>, %arg10: memref<1x1x128xf32, #tpu.memory_space<vmem>>, %arg11: memref<1x400xf32, #tpu.memory_space<vmem>>) attributes {dimension_semantics = [#tpu.dimension_semantics<parallel>], iteration_bounds = array<i64: 2>, scalar_prefetch = 0 : i64, scratch_operands = 1 : i64, tpu.core_type = #tpu.core_type<tc>, window_params = [{transform_indices = @transform_0, window_bounds = array<i64: 1, 25, 216>}, {pipeline_mode = #tpu.pipeline_mode<synchronous>, transform_indices = @transform_1, window_bounds = array<i64: 216, 128>}, {pipeline_mode = #tpu.pipeline_mode<synchronous>, transform_indices = @transform_2, window_bounds = array<i64: 1, 32>}, {pipeline_mode = #tpu.pipeline_mode<synchronous>, transform_indices = @transform_3, window_bounds = array<i64: 400, 128>}, {pipeline_mode = #tpu.pipeline_mode<synchronous>, transform_indices = @transform_4, window_bounds = array<i64: 1, 128>}, {pipeline_mode = #tpu.pipeline_mode<synchronous>, transform_indices = @transform_5, window_bounds = array<i64: 128, 128>}, {pipeline_mode = #tpu.pipeline_mode<synchronous>, transform_indices = @transform_6, window_bounds = array<i64: 1, 128>}, {pipeline_mode = #tpu.pipeline_mode<synchronous>, transform_indices = @transform_7, window_bounds = array<i64: 128, 128>}, {pipeline_mode = #tpu.pipeline_mode<synchronous>, transform_indices = @transform_8, window_bounds = array<i64: 1, 128>}, {transform_indices = @transform_9, window_bounds = array<i64: 1, 1, 128>}]} {
    %c0 = arith.constant 0 : index
    %c0_0 = arith.constant 0 : index
    %c0_1 = arith.constant 0 : index
    %0 = vector.load %arg1[%c0, %c0_0, %c0_1] : memref<1x25x216xbf16, #tpu.memory_space<vmem>>, vector<1x25x216xbf16>
    %1 = vector.shape_cast %0 : vector<1x25x216xbf16> to vector<25x216xbf16>
    %c0_2 = arith.constant 0 : index
    %c0_3 = arith.constant 0 : index
    %2 = vector.load %arg2[%c0_2, %c0_3] : memref<216x128xbf16, #tpu.memory_space<vmem>>, vector<216x128xbf16>
    %cst = arith.constant dense<0.000000e+00> : vector<25x128xf32>
    %3 = tpu.matmul %1, %2, %cst {dimension_numbers = #tpu.dot_dimension_numbers<[1], [0], [0], [1], [0, 0, 1, 1], [], []>} : vector<25x216xbf16>, vector<216x128xbf16>, vector<25x128xf32> -> vector<25x128xf32>
    %4 = vector.extract_strided_slice %3 {offsets = [0, 0], sizes = [25, 32], strides = [1, 1]} : vector<25x128xf32> to vector<25x32xf32>
    %5 = vector.extract_strided_slice %3 {offsets = [0, 32], sizes = [25, 32], strides = [1, 1]} : vector<25x128xf32> to vector<25x32xf32>
    %6 = arith.maximumf %4, %5 : vector<25x32xf32>
    %7 = vector.extract_strided_slice %3 {offsets = [0, 64], sizes = [25, 32], strides = [1, 1]} : vector<25x128xf32> to vector<25x32xf32>
    %8 = arith.maximumf %6, %7 : vector<25x32xf32>
    %9 = vector.extract_strided_slice %3 {offsets = [0, 96], sizes = [25, 32], strides = [1, 1]} : vector<25x128xf32> to vector<25x32xf32>
    %10 = arith.maximumf %8, %9 : vector<25x32xf32>
    %c0_4 = arith.constant 0 : index
    %c0_5 = arith.constant 0 : index
    %11 = vector.load %arg3[%c0_4, %c0_5] : memref<1x32xf32, #tpu.memory_space<vmem>>, vector<1x32xf32>
    %12 = vector.broadcast %11 : vector<1x32xf32> to vector<25x32xf32>
    %13 = arith.addf %10, %12 : vector<25x32xf32>
    %cst_6 = arith.constant 0.000000e+00 : f32
    %14 = vector.broadcast %cst_6 : f32 to vector<25x32xf32>
    %15 = arith.maximumf %13, %14 : vector<25x32xf32>
    %16 = vector.extract_strided_slice %15 {offsets = [0, 0], sizes = [1, 16], strides = [1, 1]} : vector<25x32xf32> to vector<1x16xf32>
    %c0_7 = arith.constant 0 : index
    %c0_8 = arith.constant 0 : index
    %17 = vector.load %arg11[%c0_7, %c0_8] : memref<1x400xf32, #tpu.memory_space<vmem>>, vector<1x16xf32>
    tpu.vector_store %arg11[%c0_7, %c0_8], %16 {strides = array<i32>} : memref<1x400xf32, #tpu.memory_space<vmem>>, vector<1x16xf32>,
    %18 = vector.extract_strided_slice %15 {offsets = [1, 0], sizes = [1, 16], strides = [1, 1]} : vector<25x32xf32> to vector<1x16xf32>
    %c0_9 = arith.constant 0 : index
    %c16 = arith.constant 16 : index
    %19 = vector.load %arg11[%c0_9, %c16] : memref<1x400xf32, #tpu.memory_space<vmem>>, vector<1x16xf32>
    tpu.vector_store %arg11[%c0_9, %c16], %18 {strides = array<i32>} : memref<1x400xf32, #tpu.memory_space<vmem>>, vector<1x16xf32>,
    %20 = vector.extract_strided_slice %15 {offsets = [2, 0], sizes = [1, 16], strides = [1, 1]} : vector<25x32xf32> to vector<1x16xf32>
    %c0_10 = arith.constant 0 : index
    %c32 = arith.constant 32 : index
    %21 = vector.load %arg11[%c0_10, %c32] : memref<1x400xf32, #tpu.memory_space<vmem>>, vector<1x16xf32>
    tpu.vector_store %arg11[%c0_10, %c32], %20 {strides = array<i32>} : memref<1x400xf32, #tpu.memory_space<vmem>>, vector<1x16xf32>,
    %22 = vector.extract_strided_slice %15 {offsets = [3, 0], sizes = [1, 16], strides = [1, 1]} : vector<25x32xf32> to vector<1x16xf32>
    %c0_11 = arith.constant 0 : index
    %c48 = arith.constant 48 : index
    %23 = vector.load %arg11[%c0_11, %c48] : memref<1x400xf32, #tpu.memory_space<vmem>>, vector<1x16xf32>
    tpu.vector_store %arg11[%c0_11, %c48], %22 {strides = array<i32>} : memref<1x400xf32, #tpu.memory_space<vmem>>, vector<1x16xf32>,
    %24 = vector.extract_strided_slice %15 {offsets = [4, 0], sizes = [1, 16], strides = [1, 1]} : vector<25x32xf32> to vector<1x16xf32>
    %c0_12 = arith.constant 0 : index
    %c64 = arith.constant 64 : index
    %25 = vector.load %arg11[%c0_12, %c64] : memref<1x400xf32, #tpu.memory_space<vmem>>, vector<1x16xf32>
    tpu.vector_store %arg11[%c0_12, %c64], %24 {strides = array<i32>} : memref<1x400xf32, #tpu.memory_space<vmem>>, vector<1x16xf32>,
    %26 = vector.extract_strided_slice %15 {offsets = [5, 0], sizes = [1, 16], strides = [1, 1]} : vector<25x32xf32> to vector<1x16xf32>
    %c0_13 = arith.constant 0 : index
    %c80 = arith.constant 80 : index
    %27 = vector.load %arg11[%c0_13, %c80] : memref<1x400xf32, #tpu.memory_space<vmem>>, vector<1x16xf32>
    tpu.vector_store %arg11[%c0_13, %c80], %26 {strides = array<i32>} : memref<1x400xf32, #tpu.memory_space<vmem>>, vector<1x16xf32>,
    %28 = vector.extract_strided_slice %15 {offsets = [6, 0], sizes = [1, 16], strides = [1, 1]} : vector<25x32xf32> to vector<1x16xf32>
    %c0_14 = arith.constant 0 : index
    %c96 = arith.constant 96 : index
    %29 = vector.load %arg11[%c0_14, %c96] : memref<1x400xf32, #tpu.memory_space<vmem>>, vector<1x16xf32>
    tpu.vector_store %arg11[%c0_14, %c96], %28 {strides = array<i32>} : memref<1x400xf32, #tpu.memory_space<vmem>>, vector<1x16xf32>,
    %30 = vector.extract_strided_slice %15 {offsets = [7, 0], sizes = [1, 16], strides = [1, 1]} : vector<25x32xf32> to vector<1x16xf32>
    %c0_15 = arith.constant 0 : index
    %c112 = arith.constant 112 : index
    %31 = vector.load %arg11[%c0_15, %c112] : memref<1x400xf32, #tpu.memory_space<vmem>>, vector<1x16xf32>
    tpu.vector_store %arg11[%c0_15, %c112], %30 {strides = array<i32>} : memref<1x400xf32, #tpu.memory_space<vmem>>, vector<1x16xf32>,
    %32 = vector.extract_strided_slice %15 {offsets = [8, 0], sizes = [1, 16], strides = [1, 1]} : vector<25x32xf32> to vector<1x16xf32>
    %c0_16 = arith.constant 0 : index
    %c128 = arith.constant 128 : index
    %33 = vector.load %arg11[%c0_16, %c128] : memref<1x400xf32, #tpu.memory_space<vmem>>, vector<1x16xf32>
    tpu.vector_store %arg11[%c0_16, %c128], %32 {strides = array<i32>} : memref<1x400xf32, #tpu.memory_space<vmem>>, vector<1x16xf32>,
    %34 = vector.extract_strided_slice %15 {offsets = [9, 0], sizes = [1, 16], strides = [1, 1]} : vector<25x32xf32> to vector<1x16xf32>
    %c0_17 = arith.constant 0 : index
    %c144 = arith.constant 144 : index
    %35 = vector.load %arg11[%c0_17, %c144] : memref<1x400xf32, #tpu.memory_space<vmem>>, vector<1x16xf32>
    tpu.vector_store %arg11[%c0_17, %c144], %34 {strides = array<i32>} : memref<1x400xf32, #tpu.memory_space<vmem>>, vector<1x16xf32>,
    %36 = vector.extract_strided_slice %15 {offsets = [10, 0], sizes = [1, 16], strides = [1, 1]} : vector<25x32xf32> to vector<1x16xf32>
    %c0_18 = arith.constant 0 : index
    %c160 = arith.constant 160 : index
    %37 = vector.load %arg11[%c0_18, %c160] : memref<1x400xf32, #tpu.memory_space<vmem>>, vector<1x16xf32>
    tpu.vector_store %arg11[%c0_18, %c160], %36 {strides = array<i32>} : memref<1x400xf32, #tpu.memory_space<vmem>>, vector<1x16xf32>,
    %38 = vector.extract_strided_slice %15 {offsets = [11, 0], sizes = [1, 16], strides = [1, 1]} : vector<25x32xf32> to vector<1x16xf32>
    %c0_19 = arith.constant 0 : index
    %c176 = arith.constant 176 : index
    %39 = vector.load %arg11[%c0_19, %c176] : memref<1x400xf32, #tpu.memory_space<vmem>>, vector<1x16xf32>
    tpu.vector_store %arg11[%c0_19, %c176], %38 {strides = array<i32>} : memref<1x400xf32, #tpu.memory_space<vmem>>, vector<1x16xf32>,
    %40 = vector.extract_strided_slice %15 {offsets = [12, 0], sizes = [1, 16], strides = [1, 1]} : vector<25x32xf32> to vector<1x16xf32>
    %c0_20 = arith.constant 0 : index
    %c192 = arith.constant 192 : index
    %41 = vector.load %arg11[%c0_20, %c192] : memref<1x400xf32, #tpu.memory_space<vmem>>, vector<1x16xf32>
    tpu.vector_store %arg11[%c0_20, %c192], %40 {strides = array<i32>} : memref<1x400xf32, #tpu.memory_space<vmem>>, vector<1x16xf32>,
    %42 = vector.extract_strided_slice %15 {offsets = [13, 0], sizes = [1, 16], strides = [1, 1]} : vector<25x32xf32> to vector<1x16xf32>
    %c0_21 = arith.constant 0 : index
    %c208 = arith.constant 208 : index
    %43 = vector.load %arg11[%c0_21, %c208] : memref<1x400xf32, #tpu.memory_space<vmem>>, vector<1x16xf32>
    tpu.vector_store %arg11[%c0_21, %c208], %42 {strides = array<i32>} : memref<1x400xf32, #tpu.memory_space<vmem>>, vector<1x16xf32>,
    %44 = vector.extract_strided_slice %15 {offsets = [14, 0], sizes = [1, 16], strides = [1, 1]} : vector<25x32xf32> to vector<1x16xf32>
    %c0_22 = arith.constant 0 : index
    %c224 = arith.constant 224 : index
    %45 = vector.load %arg11[%c0_22, %c224] : memref<1x400xf32, #tpu.memory_space<vmem>>, vector<1x16xf32>
    tpu.vector_store %arg11[%c0_22, %c224], %44 {strides = array<i32>} : memref<1x400xf32, #tpu.memory_space<vmem>>, vector<1x16xf32>,
    %46 = vector.extract_strided_slice %15 {offsets = [15, 0], sizes = [1, 16], strides = [1, 1]} : vector<25x32xf32> to vector<1x16xf32>
    %c0_23 = arith.constant 0 : index
    %c240 = arith.constant 240 : index
    %47 = vector.load %arg11[%c0_23, %c240] : memref<1x400xf32, #tpu.memory_space<vmem>>, vector<1x16xf32>
    tpu.vector_store %arg11[%c0_23, %c240], %46 {strides = array<i32>} : memref<1x400xf32, #tpu.memory_space<vmem>>, vector<1x16xf32>,
    %48 = vector.extract_strided_slice %15 {offsets = [16, 0], sizes = [1, 16], strides = [1, 1]} : vector<25x32xf32> to vector<1x16xf32>
    %c0_24 = arith.constant 0 : index
    %c256 = arith.constant 256 : index
    %49 = vector.load %arg11[%c0_24, %c256] : memref<1x400xf32, #tpu.memory_space<vmem>>, vector<1x16xf32>
    tpu.vector_store %arg11[%c0_24, %c256], %48 {strides = array<i32>} : memref<1x400xf32, #tpu.memory_space<vmem>>, vector<1x16xf32>,
    %50 = vector.extract_strided_slice %15 {offsets = [17, 0], sizes = [1, 16], strides = [1, 1]} : vector<25x32xf32> to vector<1x16xf32>
    %c0_25 = arith.constant 0 : index
    %c272 = arith.constant 272 : index
    %51 = vector.load %arg11[%c0_25, %c272] : memref<1x400xf32, #tpu.memory_space<vmem>>, vector<1x16xf32>
    tpu.vector_store %arg11[%c0_25, %c272], %50 {strides = array<i32>} : memref<1x400xf32, #tpu.memory_space<vmem>>, vector<1x16xf32>,
    %52 = vector.extract_strided_slice %15 {offsets = [18, 0], sizes = [1, 16], strides = [1, 1]} : vector<25x32xf32> to vector<1x16xf32>
    %c0_26 = arith.constant 0 : index
    %c288 = arith.constant 288 : index
    %53 = vector.load %arg11[%c0_26, %c288] : memref<1x400xf32, #tpu.memory_space<vmem>>, vector<1x16xf32>
    tpu.vector_store %arg11[%c0_26, %c288], %52 {strides = array<i32>} : memref<1x400xf32, #tpu.memory_space<vmem>>, vector<1x16xf32>,
    %54 = vector.extract_strided_slice %15 {offsets = [19, 0], sizes = [1, 16], strides = [1, 1]} : vector<25x32xf32> to vector<1x16xf32>
    %c0_27 = arith.constant 0 : index
    %c304 = arith.constant 304 : index
    %55 = vector.load %arg11[%c0_27, %c304] : memref<1x400xf32, #tpu.memory_space<vmem>>, vector<1x16xf32>
    tpu.vector_store %arg11[%c0_27, %c304], %54 {strides = array<i32>} : memref<1x400xf32, #tpu.memory_space<vmem>>, vector<1x16xf32>,
    %56 = vector.extract_strided_slice %15 {offsets = [20, 0], sizes = [1, 16], strides = [1, 1]} : vector<25x32xf32> to vector<1x16xf32>
    %c0_28 = arith.constant 0 : index
    %c320 = arith.constant 320 : index
    %57 = vector.load %arg11[%c0_28, %c320] : memref<1x400xf32, #tpu.memory_space<vmem>>, vector<1x16xf32>
    tpu.vector_store %arg11[%c0_28, %c320], %56 {strides = array<i32>} : memref<1x400xf32, #tpu.memory_space<vmem>>, vector<1x16xf32>,
    %58 = vector.extract_strided_slice %15 {offsets = [21, 0], sizes = [1, 16], strides = [1, 1]} : vector<25x32xf32> to vector<1x16xf32>
    %c0_29 = arith.constant 0 : index
    %c336 = arith.constant 336 : index
    %59 = vector.load %arg11[%c0_29, %c336] : memref<1x400xf32, #tpu.memory_space<vmem>>, vector<1x16xf32>
    tpu.vector_store %arg11[%c0_29, %c336], %58 {strides = array<i32>} : memref<1x400xf32, #tpu.memory_space<vmem>>, vector<1x16xf32>,
    %60 = vector.extract_strided_slice %15 {offsets = [22, 0], sizes = [1, 16], strides = [1, 1]} : vector<25x32xf32> to vector<1x16xf32>
    %c0_30 = arith.constant 0 : index
    %c352 = arith.constant 352 : index
    %61 = vector.load %arg11[%c0_30, %c352] : memref<1x400xf32, #tpu.memory_space<vmem>>, vector<1x16xf32>
    tpu.vector_store %arg11[%c0_30, %c352], %60 {strides = array<i32>} : memref<1x400xf32, #tpu.memory_space<vmem>>, vector<1x16xf32>,
    %62 = vector.extract_strided_slice %15 {offsets = [23, 0], sizes = [1, 16], strides = [1, 1]} : vector<25x32xf32> to vector<1x16xf32>
    %c0_31 = arith.constant 0 : index
    %c368 = arith.constant 368 : index
    %63 = vector.load %arg11[%c0_31, %c368] : memref<1x400xf32, #tpu.memory_space<vmem>>, vector<1x16xf32>
    tpu.vector_store %arg11[%c0_31, %c368], %62 {strides = array<i32>} : memref<1x400xf32, #tpu.memory_space<vmem>>, vector<1x16xf32>,
    %64 = vector.extract_strided_slice %15 {offsets = [24, 0], sizes = [1, 16], strides = [1, 1]} : vector<25x32xf32> to vector<1x16xf32>
    %c0_32 = arith.constant 0 : index
    %c384 = arith.constant 384 : index
    %65 = vector.load %arg11[%c0_32, %c384] : memref<1x400xf32, #tpu.memory_space<vmem>>, vector<1x16xf32>
    tpu.vector_store %arg11[%c0_32, %c384], %64 {strides = array<i32>} : memref<1x400xf32, #tpu.memory_space<vmem>>, vector<1x16xf32>,
    %c0_33 = arith.constant 0 : index
    %c0_34 = arith.constant 0 : index
    %66 = vector.load %arg11[%c0_33, %c0_34] : memref<1x400xf32, #tpu.memory_space<vmem>>, vector<1x400xf32>
    %67 = arith.truncf %66 : vector<1x400xf32> to vector<1x400xbf16>
    %c0_35 = arith.constant 0 : index
    %c0_36 = arith.constant 0 : index
    %68 = vector.load %arg4[%c0_35, %c0_36] : memref<400x128xbf16, #tpu.memory_space<vmem>>, vector<400x128xbf16>
    %cst_37 = arith.constant dense<0.000000e+00> : vector<1x128xf32>
    %69 = tpu.matmul %67, %68, %cst_37 {dimension_numbers = #tpu.dot_dimension_numbers<[1], [0], [0], [1], [0, 0, 1, 1], [], []>} : vector<1x400xbf16>, vector<400x128xbf16>, vector<1x128xf32> -> vector<1x128xf32>
    %c0_38 = arith.constant 0 : index
    %c0_39 = arith.constant 0 : index
    %70 = vector.load %arg5[%c0_38, %c0_39] : memref<1x128xf32, #tpu.memory_space<vmem>>, vector<1x128xf32>
    %71 = arith.addf %69, %70 : vector<1x128xf32>
    %cst_40 = arith.constant 0.000000e+00 : f32
    %72 = vector.broadcast %cst_40 : f32 to vector<1x128xf32>
    %73 = arith.maximumf %71, %72 : vector<1x128xf32>
    %74 = arith.truncf %73 : vector<1x128xf32> to vector<1x128xbf16>
    %c0_41 = arith.constant 0 : index
    %c0_42 = arith.constant 0 : index
    %75 = vector.load %arg6[%c0_41, %c0_42] : memref<128x128xbf16, #tpu.memory_space<vmem>>, vector<128x128xbf16>
    %cst_43 = arith.constant dense<0.000000e+00> : vector<1x128xf32>
    %76 = tpu.matmul %74, %75, %cst_43 {dimension_numbers = #tpu.dot_dimension_numbers<[1], [0], [0], [1], [0, 0, 1, 1], [], []>} : vector<1x128xbf16>, vector<128x128xbf16>, vector<1x128xf32> -> vector<1x128xf32>
    %c0_44 = arith.constant 0 : index
    %c0_45 = arith.constant 0 : index
    %77 = vector.load %arg7[%c0_44, %c0_45] : memref<1x128xf32, #tpu.memory_space<vmem>>, vector<1x128xf32>
    %78 = arith.addf %76, %77 : vector<1x128xf32>
    %cst_46 = arith.constant 0.000000e+00 : f32
    %79 = vector.broadcast %cst_46 : f32 to vector<1x128xf32>
    %80 = arith.maximumf %78, %79 : vector<1x128xf32>
    %81 = arith.truncf %80 : vector<1x128xf32> to vector<1x128xbf16>
    %c0_47 = arith.constant 0 : index
    %c0_48 = arith.constant 0 : index
    %82 = vector.load %arg8[%c0_47, %c0_48] : memref<128x128xbf16, #tpu.memory_space<vmem>>, vector<128x128xbf16>
    %cst_49 = arith.constant dense<0.000000e+00> : vector<1x128xf32>
    %83 = tpu.matmul %81, %82, %cst_49 {dimension_numbers = #tpu.dot_dimension_numbers<[1], [0], [0], [1], [0, 0, 1, 1], [], []>} : vector<1x128xbf16>, vector<128x128xbf16>, vector<1x128xf32> -> vector<1x128xf32>
    %c0_50 = arith.constant 0 : index
    %c0_51 = arith.constant 0 : index
    %84 = vector.load %arg9[%c0_50, %c0_51] : memref<1x128xf32, #tpu.memory_space<vmem>>, vector<1x128xf32>
    %85 = arith.addf %83, %84 : vector<1x128xf32>
    %c0_52 = arith.constant 0 : index
    %c0_53 = arith.constant 0 : index
    %c0_54 = arith.constant 0 : index
    %86 = vector.load %arg10[%c0_52, %c0_53, %c0_54] : memref<1x1x128xf32, #tpu.memory_space<vmem>>, vector<1x1x128xf32>
    %87 = vector.shape_cast %86 : vector<1x1x128xf32> to vector<1x128xf32>
    %88 = vector.shape_cast %85 : vector<1x128xf32> to vector<1x1x128xf32>
    tpu.vector_store %arg10[%c0_52, %c0_53, %c0_54], %88 {strides = array<i32>} : memref<1x1x128xf32, #tpu.memory_space<vmem>>, vector<1x1x128xf32>,
    return
  }
  func.func @transform_0(%arg0: i32) -> (i32, i32, i32) {
    %c0_i32 = arith.constant 0 : i32
    %c0_i32_0 = arith.constant 0 : i32
    %c0_i32_1 = arith.constant 0 : i32
    return %arg0, %c0_i32, %c0_i32_0 : i32, i32, i32
  }
  func.func @transform_1(%arg0: i32) -> (i32, i32) {
    %c0_i32 = arith.constant 0 : i32
    %c0_i32_0 = arith.constant 0 : i32
    %c0_i32_1 = arith.constant 0 : i32
    return %c0_i32, %c0_i32_0 : i32, i32
  }
  func.func @transform_2(%arg0: i32) -> (i32, i32) {
    %c0_i32 = arith.constant 0 : i32
    %c0_i32_0 = arith.constant 0 : i32
    %c0_i32_1 = arith.constant 0 : i32
    return %c0_i32, %c0_i32_0 : i32, i32
  }
  func.func @transform_3(%arg0: i32) -> (i32, i32) {
    %c0_i32 = arith.constant 0 : i32
    %c0_i32_0 = arith.constant 0 : i32
    %c0_i32_1 = arith.constant 0 : i32
    return %c0_i32, %c0_i32_0 : i32, i32
  }
  func.func @transform_4(%arg0: i32) -> (i32, i32) {
    %c0_i32 = arith.constant 0 : i32
    %c0_i32_0 = arith.constant 0 : i32
    %c0_i32_1 = arith.constant 0 : i32
    return %c0_i32, %c0_i32_0 : i32, i32
  }
  func.func @transform_5(%arg0: i32) -> (i32, i32) {
    %c0_i32 = arith.constant 0 : i32
    %c0_i32_0 = arith.constant 0 : i32
    %c0_i32_1 = arith.constant 0 : i32
    return %c0_i32, %c0_i32_0 : i32, i32
  }
  func.func @transform_6(%arg0: i32) -> (i32, i32) {
    %c0_i32 = arith.constant 0 : i32
    %c0_i32_0 = arith.constant 0 : i32
    %c0_i32_1 = arith.constant 0 : i32
    return %c0_i32, %c0_i32_0 : i32, i32
  }
  func.func @transform_7(%arg0: i32) -> (i32, i32) {
    %c0_i32 = arith.constant 0 : i32
    %c0_i32_0 = arith.constant 0 : i32
    %c0_i32_1 = arith.constant 0 : i32
    return %c0_i32, %c0_i32_0 : i32, i32
  }
  func.func @transform_8(%arg0: i32) -> (i32, i32) {
    %c0_i32 = arith.constant 0 : i32
    %c0_i32_0 = arith.constant 0 : i32
    %c0_i32_1 = arith.constant 0 : i32
    return %c0_i32, %c0_i32_0 : i32, i32
  }
  func.func @transform_9(%arg0: i32) -> (i32, i32, i32) {
    %c0_i32 = arith.constant 0 : i32
    %c0_i32_0 = arith.constant 0 : i32
    %c0_i32_1 = arith.constant 0 : i32
    return %arg0, %c0_i32, %c0_i32_0 : i32, i32, i32
  }
}

</mosaic_0001>

<llo_original>
// kernel: net_forward.2
$region0: #{net_forward.2}
  #allocation0 [shape = 'u32[]', space=smem, size = 0x4, offset = 0x4, fixed_abs, tag = 'smem constant byte address 0x4 - core index']
  #allocation1 [shape = 'u32[144,128]{1,0:T(1,128)}', space=vmem, size = 0x12000, scoped, tag = 'internal scratch']
  %s0 = inlined_call_operand.vmem [shape: bf16[2,196,108], index: 0, kind: input, shape index: {}]
  %s1 = inlined_call_operand.vmem [shape: bf16[108,128], index: 1, kind: input, shape index: {}]
  %s2 = inlined_call_operand.vmem [shape: f32[1,32], index: 2, kind: input, shape index: {}]
  %s3 = inlined_call_operand.vmem [shape: bf16[2,196,32], index: 3, kind: output, shape index: {}]
  %s4 = sld [smem:[#allocation0]]
  $region45: #{net_forward.2} parent=0
    _
  %s6 = ssub.s32 1, %s4
  %s7 = scalar_select 0, %s6, %s4
  loop: start=0, step=1, limit=4
  $region2: #{net_forward.2} parent=0 // loop_pre_header
    _
  $region3: #{net_forward.2} parent=0 // loop_header
    %s9 = sphi 0, %s13
    %p10 = scmp.ge.s32.totalorder %s9, 4
    %s19 = sphi 0, %s21
    %s22 = sphi 0, %s19
    %s23 = sphi 0, %s22
    %s39 = sphi 0, %s23
    %s43 = sphi 0, %s43
    %s45 = sphi 0, %s43
    %s46 = sphi 0, %s45
    %s60 = sphi 0, %s46
    %s64 = sphi 0, %s64
    %s66 = sphi 0, %s64
    %s67 = sphi 0, %s66
    %s81 = sphi 0, %s67
    %s87 = sphi 0, %s89
    %s90 = sphi 0, %s87
    %s91 = sphi 0, %s90
    %s107 = sphi 0, %s91
  $region4: #{net_forward.2} parent=0 // loop_header_branch
    %12 = sbr.rel (%p10) target = $region8
  $region5: #{net_forward.2} parent=0 // loop_body
    %s14 = ssub.s32 %s9, 1
    %s15 = ssub.s32 %s9, 2
    %s16 = sadd.s32 %s9, 1
    %s17 = ssub.s32 %s9, %s16
    %p18 = scmp.eq.s32.totalorder %s17, 0
    %s20 = sadd.s32 %s19, 1
    %s21 = scalar_select %p18, %s19, %s20
    %p24 = pneg %p18
    %p25 = scmp.eq.s32.totalorder %s9, 1
    %p26 = por %p24, %p25
    %p27 = scmp.ne.s32.totalorder %s19, %s22
    %p28 = scmp.eq.s32.totalorder %s9, 0
    %p29 = por %p27, %p28
    %p30 = scmp.ne.s32.totalorder %s19, %s22
    %p31 = scmp.eq.s32.totalorder %s14, 1
    %p32 = por %p30, %p31
    %p33 = scmp.ne.s32.totalorder %s22, %s23
    %p34 = scmp.eq.s32.totalorder %s14, 0
    %p35 = por %p33, %p34
    %p36 = scmp.ne.s32.totalorder %s22, %s23
    %p37 = scmp.eq.s32.totalorder %s15, 1
    %p38 = por %p36, %p37
    %p40 = scmp.ne.s32.totalorder %s23, %s39
    %p41 = scmp.eq.s32.totalorder %s15, 0
    %p42 = por %p40, %p41
    %s44 = sadd.s32 %s43, 1
    %p47 = scmp.eq.s32.totalorder %s9, 1
    %p48 = scmp.ne.s32.totalorder %s43, %s45
    %p49 = scmp.eq.s32.totalorder %s9, 0
    %p50 = por %p48, %p49
    %p51 = scmp.ne.s32.totalorder %s43, %s45
    %p52 = scmp.eq.s32.totalorder %s14, 1
    %p53 = por %p51, %p52
    %p54 = scmp.ne.s32.totalorder %s45, %s46
    %p55 = scmp.eq.s32.totalorder %s14, 0
    %p56 = por %p54, %p55
    %p57 = scmp.ne.s32.totalorder %s45, %s46
    %p58 = scmp.eq.s32.totalorder %s15, 1
    %p59 = por %p57, %p58
    %p61 = scmp.ne.s32.totalorder %s46, %s60
    %p62 = scmp.eq.s32.totalorder %s15, 0
    %p63 = por %p61, %p62
    %s65 = sadd.s32 %s64, 1
    %p68 = scmp.eq.s32.totalorder %s9, 1
    %p69 = scmp.ne.s32.totalorder %s64, %s66
    %p70 = scmp.eq.s32.totalorder %s9, 0
    %p71 = por %p69, %p70
    %p72 = scmp.ne.s32.totalorder %s64, %s66
    %p73 = scmp.eq.s32.totalorder %s14, 1
    %p74 = por %p72, %p73
    %p75 = scmp.ne.s32.totalorder %s66, %s67
    %p76 = scmp.eq.s32.totalorder %s14, 0
    %p77 = por %p75, %p76
    %p78 = scmp.ne.s32.totalorder %s66, %s67
    %p79 = scmp.eq.s32.totalorder %s15, 1
    %p80 = por %p78, %p79
    %p82 = scmp.ne.s32.totalorder %s67, %s81
    %p83 = scmp.eq.s32.totalorder %s15, 0
    %p84 = por %p82, %p83
    %s85 = ssub.s32 %s9, %s16
    %p86 = scmp.eq.s32.totalorder %s85, 0
    %s88 = sadd.s32 %s87, 1
    %s89 = scalar_select %p86, %s87, %s88
    %p92 = pneg %p86
    %p93 = scmp.eq.s32.totalorder %s9, 1
    %p94 = por %p92, %p93
    %p95 = scmp.ne.s32.totalorder %s87, %s90
    %p96 = scmp.eq.s32.totalorder %s9, 0
    %p97 = por %p95, %p96
    %p98 = scmp.ne.s32.totalorder %s87, %s90
    %p99 = scmp.eq.s32.totalorder %s14, 1
    %p100 = por %p98, %p99
    %p101 = scmp.ne.s32.totalorder %s90, %s91
    %p102 = scmp.eq.s32.totalorder %s14, 0
    %p103 = por %p101, %p102
    %p104 = scmp.ne.s32.totalorder %s90, %s91
    %p105 = scmp.eq.s32.totalorder %s15, 1
    %p106 = por %p104, %p105
    %p108 = scmp.ne.s32.totalorder %s91, %s107
    %p109 = scmp.eq.s32.totalorder %s15, 0
    %p110 = por %p108, %p109
    %p111 = scmp.le.s32.totalorder 1, %s9
    %p112 = scmp.lt.s32.totalorder %s9, 3
    %p113 = pnand %p111, %p112
    %p114 = pneg %p113
    // Predicated region
    $region9: #{net_forward.2} parent=5 // pred_check
      _
    $region10: #{net_forward.2} parent=5 // pred_check_branch
      %116 = sbr.rel (%p113) target = $region12
    $region11: #{net_forward.2} parent=5 // pred_region
      %s117 = ssub.s32 %s9, 1
      // Predicated region
      $region13: #{net_forward.2} parent=11 // pred_check
        %p118 = pneg %p56
      $region14: #{net_forward.2} parent=11 // pred_check_branch
        %120 = sbr.rel (%p118) target = $region16
      $region15: #{net_forward.2} parent=11 // pred_region
        _
      $region16: #{net_forward.2} parent=11 // pred_fallthru
        _
      // Predicated region
      $region17: #{net_forward.2} parent=11 // pred_check
        %p121 = pneg %p77
      $region18: #{net_forward.2} parent=11 // pred_check_branch
        %123 = sbr.rel (%p121) target = $region20
      $region19: #{net_forward.2} parent=11 // pred_region
        _
      $region20: #{net_forward.2} parent=11 // pred_fallthru
        _
    $region12: #{net_forward.2} parent=5 // pred_fallthru
      _
    %p124 = scmp.lt.s32.totalorder %s9, 2
    // Predicated region
    $region21: #{net_forward.2} parent=5 // pred_check
      %p125 = pneg %p124
    $region22: #{net_forward.2} parent=5 // pred_check_branch
      %127 = sbr.rel (%p125) target = $region24
    $region23: #{net_forward.2} parent=5 // pred_region
      // Predicated region
      $region25: #{net_forward.2} parent=23 // pred_check
        %p128 = pneg %p29
      $region26: #{net_forward.2} parent=23 // pred_check_branch
        %130 = sbr.rel (%p128) target = $region28
      $region27: #{net_forward.2} parent=23 // pred_region
        %p131 = scmp.lt.s32.totalorder %s9, 1
        %s132 = scalar_select %p131, %s9, 1
        %s133 = smul.addr %s132, 25
        %s134 = smul.addr %s133, 4
        %s135 = scalar_lea.vmem %s0, %s134
      $region28: #{net_forward.2} parent=23 // pred_fallthru
        _
    $region24: #{net_forward.2} parent=5 // pred_fallthru
      _
    %p136 = scmp.le.s32.totalorder 1, %s9
    %p137 = scmp.lt.s32.totalorder %s9, 3
    %p138 = pnand %p136, %p137
    %p139 = pneg %p138
    // Predicated region
    $region29: #{net_forward.2} parent=5 // pred_check
      _
    $region30: #{net_forward.2} parent=5 // pred_check_branch
      %141 = sbr.rel (%p138) target = $region32
    $region31: #{net_forward.2} parent=5 // pred_region
      %s142 = ssub.s32 %s9, 1
      %p143 = scmp.lt.s32.totalorder %s14, 1
      %s144 = scalar_select %p143, %s14, 1
      %s145 = smul.addr %s144, 25
      %s146 = smul.addr %s145, 4
      %s147 = scalar_lea.vmem %s0, %s146
      %p148 = pneg %p35
      %p149 = pneg %p32
      %p150 = pneg %p56
      %p151 = pneg %p53
      %p152 = pneg %p77
      %p153 = pneg %p74
      %p154 = pneg %p103
      %p155 = pneg %p100
      %p156 = scmp.lt.s32.totalorder %s14, 1
      %s157 = scalar_select %p156, %s14, 1
      %s158 = smul.addr %s157, 25
      %s159 = smul.addr %s158, 4
      %s160 = scalar_lea.vmem %s3, %s159
      %p161 = scmp.lt.s32.totalorder %s14, 1
      %s162 = scalar_select %p161, %s14, 1
      %s163 = smul.addr %s162, 25
      %s164 = smul.addr %s163, 4
      %s165 = scalar_lea.vmem %s0, %s164
      %p166 = scmp.lt.s32.totalorder %s14, 1
      %s167 = scalar_select %p166, %s14, 1
      %s168 = smul.addr %s167, 25
      %s169 = smul.addr %s168, 4
      %s170 = scalar_lea.vmem %s3, %s169
      %v172 = vld [vmem:[%s1] sm:$0xf]
      %v173 = vld [vmem:[%s1 + $0x4] sm:$0xf]
      %v174 = vld [vmem:[%s1 + $0x8] sm:$0xf]
      %v175 = vld [vmem:[%s1 + $0xc] sm:$0xf]
      %v176 = vld [vmem:[%s1 + $0x10] sm:$0xf]
      %v177 = vld [vmem:[%s1 + $0x14] sm:$0xf]
      %v178 = vld [vmem:[%s1 + $0x18] sm:$0xf]
      %v179 = vld [vmem:[%s1 + $0x1c] sm:$0xf]
      %v180 = vld [vmem:[%s1 + $0x20] sm:$0xf]
      %v181 = vld [vmem:[%s1 + $0x24] sm:$0xf]
      %v182 = vld [vmem:[%s1 + $0x28] sm:$0xf]
      %v183 = vld [vmem:[%s1 + $0x2c] sm:$0xf]
      %v184 = vld [vmem:[%s1 + $0x30] sm:$0xf]
      %v185 = vld [vmem:[%s1 + $0x34] sm:$0x3]
      %v186 = vld [vmem:[%s2] sm:$0x1]
      %v187 = vld [vmem:[%s165] sm:$0xf]
      %v188 = vld [vmem:[%s165 + $0x4] sm:$0xf]
      %v189 = vld [vmem:[%s165 + $0x8] sm:$0xf]
      %v190 = vld [vmem:[%s165 + $0xc] sm:$0xf]
      %v191 = vld [vmem:[%s165 + $0x10] sm:$0xf]
      %v192 = vld [vmem:[%s165 + $0x14] sm:$0xf]
      %v193 = vld [vmem:[%s165 + $0x18] sm:$0xf]
      %v194 = vld [vmem:[%s165 + $0x1c] sm:$0xf]
      %v195 = vld [vmem:[%s165 + $0x20] sm:$0xf]
      %v196 = vld [vmem:[%s165 + $0x24] sm:$0xf]
      %v197 = vld [vmem:[%s165 + $0x28] sm:$0xf]
      %v198 = vld [vmem:[%s165 + $0x2c] sm:$0xf]
      %v199 = vld [vmem:[%s165 + $0x30] sm:$0xf]
      %v200 = vld [vmem:[%s165 + $0x34] sm:$0xf]
      %v201 = vld [vmem:[%s165 + $0x38] sm:$0xf]
      %v202 = vld [vmem:[%s165 + $0x3c] sm:$0xf]
      %v203 = vld [vmem:[%s165 + $0x40] sm:$0xf]
      %v204 = vld [vmem:[%s165 + $0x44] sm:$0xf]
      %v205 = vld [vmem:[%s165 + $0x48] sm:$0xf]
      %v206 = vld [vmem:[%s165 + $0x4c] sm:$0xf]
      %v207 = vld [vmem:[%s165 + $0x50] sm:$0xf]
      %v208 = vld [vmem:[%s165 + $0x54] sm:$0xf]
      %v209 = vld [vmem:[%s165 + $0x58] sm:$0xf]
      %v210 = vld [vmem:[%s165 + $0x5c] sm:$0xf]
      %v211 = vld [vmem:[%s165 + $0x60] sm:$0x3]
      %v237 = vunpack.c.l.b16 %v187
      %v238 = vunpack.c.l.b16 %v188
      %v239 = vunpack.c.l.b16 %v189
      %v240 = vunpack.c.l.b16 %v190
      %v241 = vunpack.c.l.b16 %v191
      %v242 = vunpack.c.l.b16 %v192
      %v243 = vunpack.c.l.b16 %v193
      %v244 = vunpack.c.l.b16 %v194
      %v245 = vunpack.c.l.b16 %v195
      %v246 = vunpack.c.l.b16 %v196
      %v247 = vunpack.c.l.b16 %v197
      %v248 = vunpack.c.l.b16 %v198
      %v249 = vunpack.c.l.b16 %v199
      %v250 = vunpack.c.l.b16 %v200
      %v251 = vunpack.c.l.b16 %v201
      %v252 = vunpack.c.l.b16 %v202
      %v253 = vunpack.c.l.b16 %v203
      %v254 = vunpack.c.l.b16 %v204
      %v255 = vunpack.c.l.b16 %v205
      %v256 = vunpack.c.l.b16 %v206
      %v257 = vunpack.c.l.b16 %v207
      %v258 = vunpack.c.l.b16 %v208
      %v259 = vunpack.c.l.b16 %v209
      %v260 = vunpack.c.l.b16 %v210
      %v261 = vunpack.c.l.b16 %v211
      %v262 = vpack.c.b16 %v238, %v237
      %v263 = vpack.c.b16 %v240, %v239
      %v264 = vpack.c.b16 %v242, %v241
      %v265 = vpack.c.b16 %v244, %v243
      %v266 = vpack.c.b16 %v246, %v245
      %v267 = vpack.c.b16 %v248, %v247
      %v268 = vpack.c.b16 %v250, %v249
      %v269 = vpack.c.b16 %v252, %v251
      %v270 = vpack.c.b16 %v254, %v253
      %v271 = vpack.c.b16 %v256, %v255
      %v272 = vpack.c.b16 %v258, %v257
      %v273 = vpack.c.b16 %v260, %v259
      %v274 = vpack.c.b16 %v261, %v261
      %v289 = vunpack.c.l.b16 %v172
      %v290 = vunpack.c.l.b16 %v173
      %v291 = vunpack.c.l.b16 %v174
      %v292 = vunpack.c.l.b16 %v175
      %v293 = vunpack.c.l.b16 %v176
      %v294 = vunpack.c.l.b16 %v177
      %v295 = vunpack.c.l.b16 %v178
      %v296 = vunpack.c.l.b16 %v179
      %v297 = vunpack.c.l.b16 %v180
      %v298 = vunpack.c.l.b16 %v181
      %v299 = vunpack.c.l.b16 %v182
      %v300 = vunpack.c.l.b16 %v183
      %v301 = vunpack.c.l.b16 %v184
      %v302 = vunpack.c.l.b16 %v185
      %v303 = vpack.c.b16 %v290, %v289
      %v304 = vpack.c.b16 %v292, %v291
      %v305 = vpack.c.b16 %v294, %v293
      %v306 = vpack.c.b16 %v296, %v295
      %v307 = vpack.c.b16 %v298, %v297
      %v308 = vpack.c.b16 %v300, %v299
      %v309 = vpack.c.b16 %v302, %v301
      %vm316 = vcmask 883712
      %v318 = vsel %vm316, %v262, 0
      %v321 = vsel %vm316, %v263, 0
      %v324 = vsel %vm316, %v264, 0
      %v327 = vsel %vm316, %v265, 0
      %v330 = vsel %vm316, %v266, 0
      %v333 = vsel %vm316, %v267, 0
      %v336 = vsel %vm316, %v268, 0
      %v339 = vsel %vm316, %v269, 0
      %v342 = vsel %vm316, %v270, 0
      %v345 = vsel %vm316, %v271, 0
      %v348 = vsel %vm316, %v272, 0
      %v351 = vsel %vm316, %v273, 0
      %v354 = vsel %vm316, %v274, 0
      %vm356 = vcmask 1045504
      %v358 = vsel %vm356, %v309, 0
      %360 = vmatprep.subr.bf16.mxu0 0
      %361 = vmatpush1.bf16.msra.mxu0 %v303
      %362 = vmatprep.subr.bf16.mxu0 0
      %363 = vmatpush1.bf16.msra.mxu0 %v304
      %364 = vmatprep.subr.bf16.mxu0 0
      %365 = vmatpush1.bf16.msra.mxu0 %v305
      %366 = vmatprep.subr.bf16.mxu0 0
      %367 = vmatpush1.bf16.msra.mxu0 %v306
      %368 = vmatprep.subr.bf16.mxu0 0
      %369 = vmatpush1.bf16.msra.mxu0 %v307
      %370 = vmatprep.subr.bf16.mxu0 0
      %371 = vmatpush1.bf16.msra.mxu0 %v308
      %372 = vmatprep.subr.bf16.mxu0 0
      %373 = vmatpush1.bf16.msra.mxu0 %v358
      %374 = vmatprep.subr.bf16.mxu0 0
      %375 = vmatpush1.bf16.msra.mxu0 0
      %376 = vmatprep.subr.bf16.mxu0 0
      %377 = vmatpush1.bf16.msra.mxu0 0
      %378 = vmatprep.subr.bf16.mxu0 0
      %379 = vmatpush1.bf16.msra.mxu0 0
      %380 = vmatprep.subr.bf16.mxu0 0
      %381 = vmatpush1.bf16.msra.mxu0 0
      %382 = vmatprep.subr.bf16.mxu0 0
      %383 = vmatpush1.bf16.msra.mxu0 0
      %384 = vmatprep.subr.bf16.mxu0 0
      %385 = vmatpush1.bf16.msra.mxu0 0
      %386 = vmatprep.subr.bf16.mxu0 0
      %387 = vmatpush1.bf16.msra.mxu0 0
      %388 = vmatprep.subr.bf16.mxu0 0
      %389 = vmatpush1.bf16.msra.mxu0 0
      %390 = vmatprep.subr.bf16.mxu0 0
      %391 = vmatpush1.bf16.msra.mxu0 0
      %392 = vmatprep.mubr.bf16.mxu0 0
      %393 = vmatmul.mubr.bf16.gmra.mrb[0].mxu0 %v318
      %v394 = vpop.f32.mrb[0].mxu0
      %v395 = vadd.f32 0.0, %v394
      %v396 = vpop.f32.mrb[0].mxu0
      %v397 = vpop.f32.mrb[0].mxu0
      %v398 = vadd.f32 0.0, %v397
      %v399 = vpop.f32.mrb[0].mxu0
      %400 = vmatprep.mubr.bf16.mxu0 0
      %401 = vmatmul.mubr.bf16.gmra.mrb[0].mxu0 %v321
      %v402 = vpop.f32.mrb[0].mxu0
      %v403 = vadd.f32 0.0, %v402
      %v404 = vpop.f32.mrb[0].mxu0
      %v405 = vpop.f32.mrb[0].mxu0
      %v406 = vadd.f32 0.0, %v405
      %v407 = vpop.f32.mrb[0].mxu0
      %408 = vmatprep.mubr.bf16.mxu0 0
      %409 = vmatmul.mubr.bf16.gmra.mrb[0].mxu0 %v324
      %v410 = vpop.f32.mrb[0].mxu0
      %v411 = vadd.f32 0.0, %v410
      %v412 = vpop.f32.mrb[0].mxu0
      %v413 = vpop.f32.mrb[0].mxu0
      %v414 = vadd.f32 0.0, %v413
      %v415 = vpop.f32.mrb[0].mxu0
      %416 = vmatprep.mubr.bf16.mxu0 0
      %417 = vmatmul.mubr.bf16.gmra.mrb[0].mxu0 %v327
      %v418 = vpop.f32.mrb[0].mxu0
      %v419 = vadd.f32 0.0, %v418
      %v420 = vpop.f32.mrb[0].mxu0
      %v421 = vpop.f32.mrb[0].mxu0
      %v422 = vadd.f32 0.0, %v421
      %v423 = vpop.f32.mrb[0].mxu0
      %424 = vmatprep.mubr.bf16.mxu0 0
      %425 = vmatmul.mubr.bf16.gmra.mrb[0].mxu0 %v330
      %v426 = vpop.f32.mrb[0].mxu0
      %v427 = vadd.f32 0.0, %v426
      %v428 = vpop.f32.mrb[0].mxu0
      %v429 = vpop.f32.mrb[0].mxu0
      %v430 = vadd.f32 0.0, %v429
      %v431 = vpop.f32.mrb[0].mxu0
      %432 = vmatprep.mubr.bf16.mxu0 0
      %433 = vmatmul.mubr.bf16.gmra.mrb[0].mxu0 %v333
      %v434 = vpop.f32.mrb[0].mxu0
      %v435 = vadd.f32 0.0, %v434
      %v436 = vpop.f32.mrb[0].mxu0
      %v437 = vpop.f32.mrb[0].mxu0
      %v438 = vadd.f32 0.0, %v437
      %v439 = vpop.f32.mrb[0].mxu0
      %440 = vmatprep.mubr.bf16.mxu0 0
      %441 = vmatmul.mubr.bf16.gmra.mrb[0].mxu0 %v336
      %v442 = vpop.f32.mrb[0].mxu0
      %v443 = vadd.f32 0.0, %v442
      %v444 = vpop.f32.mrb[0].mxu0
      %v445 = vpop.f32.mrb[0].mxu0
      %v446 = vadd.f32 0.0, %v445
      %v447 = vpop.f32.mrb[0].mxu0
      %448 = vmatprep.mubr.bf16.mxu0 0
      %449 = vmatmul.mubr.bf16.gmra.mrb[0].mxu0 %v339
      %v450 = vpop.f32.mrb[0].mxu0
      %v451 = vadd.f32 0.0, %v450
      %v452 = vpop.f32.mrb[0].mxu0
      %v453 = vpop.f32.mrb[0].mxu0
      %v454 = vadd.f32 0.0, %v453
      %v455 = vpop.f32.mrb[0].mxu0
      %456 = vmatprep.mubr.bf16.mxu0 0
      %457 = vmatmul.mubr.bf16.gmra.mrb[0].mxu0 %v342
      %v458 = vpop.f32.mrb[0].mxu0
      %v459 = vadd.f32 0.0, %v458
      %v460 = vpop.f32.mrb[0].mxu0
      %v461 = vpop.f32.mrb[0].mxu0
      %v462 = vadd.f32 0.0, %v461
      %v463 = vpop.f32.mrb[0].mxu0
      %464 = vmatprep.mubr.bf16.mxu0 0
      %465 = vmatmul.mubr.bf16.gmra.mrb[0].mxu0 %v345
      %v466 = vpop.f32.mrb[0].mxu0
      %v467 = vadd.f32 0.0, %v466
      %v468 = vpop.f32.mrb[0].mxu0
      %v469 = vpop.f32.mrb[0].mxu0
      %v470 = vadd.f32 0.0, %v469
      %v471 = vpop.f32.mrb[0].mxu0
      %472 = vmatprep.mubr.bf16.mxu0 0
      %473 = vmatmul.mubr.bf16.gmra.mrb[0].mxu0 %v348
      %v474 = vpop.f32.mrb[0].mxu0
      %v475 = vadd.f32 0.0, %v474
      %v476 = vpop.f32.mrb[0].mxu0
      %v477 = vpop.f32.mrb[0].mxu0
      %v478 = vadd.f32 0.0, %v477
      %v479 = vpop.f32.mrb[0].mxu0
      %480 = vmatprep.mubr.bf16.mxu0 0
      %481 = vmatmul.mubr.bf16.gmra.mrb[0].mxu0 %v351
      %v482 = vpop.f32.mrb[0].mxu0
      %v483 = vadd.f32 0.0, %v482
      %v484 = vpop.f32.mrb[0].mxu0
      %v485 = vpop.f32.mrb[0].mxu0
      %v486 = vadd.f32 0.0, %v485
      %v487 = vpop.f32.mrb[0].mxu0
      %488 = vmatprep.mubr.bf16.mxu0 0
      %489 = vmatmul.mubr.bf16.gmra.mrb[0].mxu0 %v354
      %v490 = vpop.f32.mrb[0].mxu0
      %v491 = vadd.f32 0.0, %v490
      %v492 = vpop.f32.mrb[0].mxu0
      %v493 = vpop.f32.mrb[0].mxu0
      %v494 = vpop.f32.mrb[0].mxu0
      %495 = vdwg.mxu0
      %521 = vrot.lane.b32.xlu0 %v395, 96
      %v522 = vpop.permute.xlu0 %521
      %523 = vrot.lane.b32.xlu0 %v398, 96
      %v524 = vpop.permute.xlu0 %523
      %525 = vrot.lane.b32.xlu0 %v403, 96
      %v526 = vpop.permute.xlu0 %525
      %527 = vrot.lane.b32.xlu0 %v406, 96
      %v528 = vpop.permute.xlu0 %527
      %529 = vrot.lane.b32.xlu0 %v411, 96
      %v530 = vpop.permute.xlu0 %529
      %531 = vrot.lane.b32.xlu0 %v414, 96
      %v532 = vpop.permute.xlu0 %531
      %533 = vrot.lane.b32.xlu0 %v419, 96
      %v534 = vpop.permute.xlu0 %533
      %535 = vrot.lane.b32.xlu0 %v422, 96
      %v536 = vpop.permute.xlu0 %535
      %537 = vrot.lane.b32.xlu0 %v427, 96
      %v538 = vpop.permute.xlu0 %537
      %539 = vrot.lane.b32.xlu0 %v430, 96
      %v540 = vpop.permute.xlu0 %539
      %541 = vrot.lane.b32.xlu0 %v435, 96
      %v542 = vpop.permute.xlu0 %541
      %543 = vrot.lane.b32.xlu0 %v438, 96
      %v544 = vpop.permute.xlu0 %543
      %545 = vrot.lane.b32.xlu0 %v443, 96
      %v546 = vpop.permute.xlu0 %545
      %547 = vrot.lane.b32.xlu0 %v446, 96
      %v548 = vpop.permute.xlu0 %547
      %549 = vrot.lane.b32.xlu0 %v451, 96
      %v550 = vpop.permute.xlu0 %549
      %551 = vrot.lane.b32.xlu0 %v454, 96
      %v552 = vpop.permute.xlu0 %551
      %553 = vrot.lane.b32.xlu0 %v459, 96
      %v554 = vpop.permute.xlu0 %553
      %555 = vrot.lane.b32.xlu0 %v462, 96
      %v556 = vpop.permute.xlu0 %555
      %557 = vrot.lane.b32.xlu0 %v467, 96
      %v558 = vpop.permute.xlu0 %557
      %559 = vrot.lane.b32.xlu0 %v470, 96
      %v560 = vpop.permute.xlu0 %559
      %561 = vrot.lane.b32.xlu0 %v475, 96
      %v562 = vpop.permute.xlu0 %561
      %563 = vrot.lane.b32.xlu0 %v478, 96
      %v564 = vpop.permute.xlu0 %563
      %565 = vrot.lane.b32.xlu0 %v483, 96
      %v566 = vpop.permute.xlu0 %565
      %567 = vrot.lane.b32.xlu0 %v486, 96
      %v568 = vpop.permute.xlu0 %567
      %569 = vrot.lane.b32.xlu0 %v491, 96
      %v570 = vpop.permute.xlu0 %569
      %v596 = vmax.f32 %v395, %v522
      %v597 = vmax.f32 %v398, %v524
      %v598 = vmax.f32 %v403, %v526
      %v599 = vmax.f32 %v406, %v528
      %v600 = vmax.f32 %v411, %v530
      %v601 = vmax.f32 %v414, %v532
      %v602 = vmax.f32 %v419, %v534
      %v603 = vmax.f32 %v422, %v536
      %v604 = vmax.f32 %v427, %v538
      %v605 = vmax.f32 %v430, %v540
      %v606 = vmax.f32 %v435, %v542
      %v607 = vmax.f32 %v438, %v544
      %v608 = vmax.f32 %v443, %v546
      %v609 = vmax.f32 %v446, %v548
      %v610 = vmax.f32 %v451, %v550
      %v611 = vmax.f32 %v454, %v552
      %v612 = vmax.f32 %v459, %v554
      %v613 = vmax.f32 %v462, %v556
      %v614 = vmax.f32 %v467, %v558
      %v615 = vmax.f32 %v470, %v560
      %v616 = vmax.f32 %v475, %v562
      %v617 = vmax.f32 %v478, %v564
      %v618 = vmax.f32 %v483, %v566
      %v619 = vmax.f32 %v486, %v568
      %v620 = vmax.f32 %v491, %v570
      %621 = vrot.lane.b32.xlu0 %v395, 64
      %v622 = vpop.permute.xlu0 %621
      %623 = vrot.lane.b32.xlu0 %v398, 64
      %v624 = vpop.permute.xlu0 %623
      %625 = vrot.lane.b32.xlu0 %v403, 64
      %v626 = vpop.permute.xlu0 %625
      %627 = vrot.lane.b32.xlu0 %v406, 64
      %v628 = vpop.permute.xlu0 %627
      %629 = vrot.lane.b32.xlu0 %v411, 64
      %v630 = vpop.permute.xlu0 %629
      %631 = vrot.lane.b32.xlu0 %v414, 64
      %v632 = vpop.permute.xlu0 %631
      %633 = vrot.lane.b32.xlu0 %v419, 64
      %v634 = vpop.permute.xlu0 %633
      %635 = vrot.lane.b32.xlu0 %v422, 64
      %v636 = vpop.permute.xlu0 %635
      %637 = vrot.lane.b32.xlu0 %v427, 64
      %v638 = vpop.permute.xlu0 %637
      %639 = vrot.lane.b32.xlu0 %v430, 64
      %v640 = vpop.permute.xlu0 %639
      %641 = vrot.lane.b32.xlu0 %v435, 64
      %v642 = vpop.permute.xlu0 %641
      %643 = vrot.lane.b32.xlu0 %v438, 64
      %v644 = vpop.permute.xlu0 %643
      %645 = vrot.lane.b32.xlu0 %v443, 64
      %v646 = vpop.permute.xlu0 %645
      %647 = vrot.lane.b32.xlu0 %v446, 64
      %v648 = vpop.permute.xlu0 %647
      %649 = vrot.lane.b32.xlu0 %v451, 64
      %v650 = vpop.permute.xlu0 %649
      %651 = vrot.lane.b32.xlu0 %v454, 64
      %v652 = vpop.permute.xlu0 %651
      %653 = vrot.lane.b32.xlu0 %v459, 64
      %v654 = vpop.permute.xlu0 %653
      %655 = vrot.lane.b32.xlu0 %v462, 64
      %v656 = vpop.permute.xlu0 %655
      %657 = vrot.lane.b32.xlu0 %v467, 64
      %v658 = vpop.permute.xlu0 %657
      %659 = vrot.lane.b32.xlu0 %v470, 64
      %v660 = vpop.permute.xlu0 %659
      %661 = vrot.lane.b32.xlu0 %v475, 64
      %v662 = vpop.permute.xlu0 %661
      %663 = vrot.lane.b32.xlu0 %v478, 64
      %v664 = vpop.permute.xlu0 %663
      %665 = vrot.lane.b32.xlu0 %v483, 64
      %v666 = vpop.permute.xlu0 %665
      %667 = vrot.lane.b32.xlu0 %v486, 64
      %v668 = vpop.permute.xlu0 %667
      %669 = vrot.lane.b32.xlu0 %v491, 64
      %v670 = vpop.permute.xlu0 %669
      %v696 = vmax.f32 %v596, %v622
      %v697 = vmax.f32 %v597, %v624
      %v698 = vmax.f32 %v598, %v626
      %v699 = vmax.f32 %v599, %v628
      %v700 = vmax.f32 %v600, %v630
      %v701 = vmax.f32 %v601, %v632
      %v702 = vmax.f32 %v602, %v634
      %v703 = vmax.f32 %v603, %v636
      %v704 = vmax.f32 %v604, %v638
      %v705 = vmax.f32 %v605, %v640
      %v706 = vmax.f32 %v606, %v642
      %v707 = vmax.f32 %v607, %v644
      %v708 = vmax.f32 %v608, %v646
      %v709 = vmax.f32 %v609, %v648
      %v710 = vmax.f32 %v610, %v650
      %v711 = vmax.f32 %v611, %v652
      %v712 = vmax.f32 %v612, %v654
      %v713 = vmax.f32 %v613, %v656
      %v714 = vmax.f32 %v614, %v658
      %v715 = vmax.f32 %v615, %v660
      %v716 = vmax.f32 %v616, %v662
      %v717 = vmax.f32 %v617, %v664
      %v718 = vmax.f32 %v618, %v666
      %v719 = vmax.f32 %v619, %v668
      %v720 = vmax.f32 %v620, %v670
      %721 = vrot.lane.b32.xlu0 %v395, 32
      %v722 = vpop.permute.xlu0 %721
      %723 = vrot.lane.b32.xlu0 %v398, 32
      %v724 = vpop.permute.xlu0 %723
      %725 = vrot.lane.b32.xlu0 %v403, 32
      %v726 = vpop.permute.xlu0 %725
      %727 = vrot.lane.b32.xlu0 %v406, 32
      %v728 = vpop.permute.xlu0 %727
      %729 = vrot.lane.b32.xlu0 %v411, 32
      %v730 = vpop.permute.xlu0 %729
      %731 = vrot.lane.b32.xlu0 %v414, 32
      %v732 = vpop.permute.xlu0 %731
      %733 = vrot.lane.b32.xlu0 %v419, 32
      %v734 = vpop.permute.xlu0 %733
      %735 = vrot.lane.b32.xlu0 %v422, 32
      %v736 = vpop.permute.xlu0 %735
      %737 = vrot.lane.b32.xlu0 %v427, 32
      %v738 = vpop.permute.xlu0 %737
      %739 = vrot.lane.b32.xlu0 %v430, 32
      %v740 = vpop.permute.xlu0 %739
      %741 = vrot.lane.b32.xlu0 %v435, 32
      %v742 = vpop.permute.xlu0 %741
      %743 = vrot.lane.b32.xlu0 %v438, 32
      %v744 = vpop.permute.xlu0 %743
      %745 = vrot.lane.b32.xlu0 %v443, 32
      %v746 = vpop.permute.xlu0 %745
      %747 = vrot.lane.b32.xlu0 %v446, 32
      %v748 = vpop.permute.xlu0 %747
      %749 = vrot.lane.b32.xlu0 %v451, 32
      %v750 = vpop.permute.xlu0 %749
      %751 = vrot.lane.b32.xlu0 %v454, 32
      %v752 = vpop.permute.xlu0 %751
      %753 = vrot.lane.b32.xlu0 %v459, 32
      %v754 = vpop.permute.xlu0 %753
      %755 = vrot.lane.b32.xlu0 %v462, 32
      %v756 = vpop.permute.xlu0 %755
      %757 = vrot.lane.b32.xlu0 %v467, 32
      %v758 = vpop.permute.xlu0 %757
      %759 = vrot.lane.b32.xlu0 %v470, 32
      %v760 = vpop.permute.xlu0 %759
      %761 = vrot.lane.b32.xlu0 %v475, 32
      %v762 = vpop.permute.xlu0 %761
      %763 = vrot.lane.b32.xlu0 %v478, 32
      %v764 = vpop.permute.xlu0 %763
      %765 = vrot.lane.b32.xlu0 %v483, 32
      %v766 = vpop.permute.xlu0 %765
      %767 = vrot.lane.b32.xlu0 %v486, 32
      %v768 = vpop.permute.xlu0 %767
      %769 = vrot.lane.b32.xlu0 %v491, 32
      %v770 = vpop.permute.xlu0 %769
      %v796 = vmax.f32 %v696, %v722
      %v797 = vmax.f32 %v697, %v724
      %v798 = vmax.f32 %v698, %v726
      %v799 = vmax.f32 %v699, %v728
      %v800 = vmax.f32 %v700, %v730
      %v801 = vmax.f32 %v701, %v732
      %v802 = vmax.f32 %v702, %v734
      %v803 = vmax.f32 %v703, %v736
      %v804 = vmax.f32 %v704, %v738
      %v805 = vmax.f32 %v705, %v740
      %v806 = vmax.f32 %v706, %v742
      %v807 = vmax.f32 %v707, %v744
      %v808 = vmax.f32 %v708, %v746
      %v809 = vmax.f32 %v709, %v748
      %v810 = vmax.f32 %v710, %v750
      %v811 = vmax.f32 %v711, %v752
      %v812 = vmax.f32 %v712, %v754
      %v813 = vmax.f32 %v713, %v756
      %v814 = vmax.f32 %v714, %v758
      %v815 = vmax.f32 %v715, %v760
      %v816 = vmax.f32 %v716, %v762
      %v817 = vmax.f32 %v717, %v764
      %v818 = vmax.f32 %v718, %v766
      %v819 = vmax.f32 %v719, %v768
      %v820 = vmax.f32 %v720, %v770
      %v822 = vlaneseq
      %v823 = vshrl.u32 %v822, 7
      %v824 = vsub.s32 0, %v823
      %v825 = vrot.slane %v186, %v824
      %v827 = vadd.f32 %v796, %v825
      %v828 = vadd.f32 %v797, %v825
      %v829 = vadd.f32 %v798, %v825
      %v830 = vadd.f32 %v799, %v825
      %v831 = vadd.f32 %v800, %v825
      %v832 = vadd.f32 %v801, %v825
      %v833 = vadd.f32 %v802, %v825
      %v834 = vadd.f32 %v803, %v825
      %v835 = vadd.f32 %v804, %v825
      %v836 = vadd.f32 %v805, %v825
      %v837 = vadd.f32 %v806, %v825
      %v838 = vadd.f32 %v807, %v825
      %v839 = vadd.f32 %v808, %v825
      %v840 = vadd.f32 %v809, %v825
      %v841 = vadd.f32 %v810, %v825
      %v842 = vadd.f32 %v811, %v825
      %v843 = vadd.f32 %v812, %v825
      %v844 = vadd.f32 %v813, %v825
      %v845 = vadd.f32 %v814, %v825
      %v846 = vadd.f32 %v815, %v825
      %v847 = vadd.f32 %v816, %v825
      %v848 = vadd.f32 %v817, %v825
      %v849 = vadd.f32 %v818, %v825
      %v850 = vadd.f32 %v819, %v825
      %v851 = vadd.f32 %v820, %v825
      %v852 = vmax.f32 %v827, 0.0
      %v853 = vmax.f32 %v828, 0.0
      %v854 = vmax.f32 %v829, 0.0
      %v855 = vmax.f32 %v830, 0.0
      %v856 = vmax.f32 %v831, 0.0
      %v857 = vmax.f32 %v832, 0.0
      %v858 = vmax.f32 %v833, 0.0
      %v859 = vmax.f32 %v834, 0.0
      %v860 = vmax.f32 %v835, 0.0
      %v861 = vmax.f32 %v836, 0.0
      %v862 = vmax.f32 %v837, 0.0
      %v863 = vmax.f32 %v838, 0.0
      %v864 = vmax.f32 %v839, 0.0
      %v865 = vmax.f32 %v840, 0.0
      %v866 = vmax.f32 %v841, 0.0
      %v867 = vmax.f32 %v842, 0.0
      %v868 = vmax.f32 %v843, 0.0
      %v869 = vmax.f32 %v844, 0.0
      %v870 = vmax.f32 %v845, 0.0
      %v871 = vmax.f32 %v846, 0.0
      %v872 = vmax.f32 %v847, 0.0
      %v873 = vmax.f32 %v848, 0.0
      %v874 = vmax.f32 %v849, 0.0
      %v875 = vmax.f32 %v850, 0.0
      %v876 = vmax.f32 %v851, 0.0
      %v877 = vpack.c.bf16 %v853, %v852
      %v878 = vpack.c.bf16 %v855, %v854
      %v879 = vpack.c.bf16 %v857, %v856
      %v880 = vpack.c.bf16 %v859, %v858
      %v881 = vpack.c.bf16 %v861, %v860
      %v882 = vpack.c.bf16 %v863, %v862
      %v883 = vpack.c.bf16 %v865, %v864
      %v884 = vpack.c.bf16 %v867, %v866
      %v885 = vpack.c.bf16 %v869, %v868
      %v886 = vpack.c.bf16 %v871, %v870
      %v887 = vpack.c.bf16 %v873, %v872
      %v888 = vpack.c.bf16 %v875, %v874
      %v889 = vpack.c.bf16 %v876, %v876
      %v903 = vunpack.c.l.b16 %v877
      %v904 = vunpack.c.h.b16 %v877
      %v905 = vunpack.c.l.b16 %v878
      %v906 = vunpack.c.h.b16 %v878
      %v907 = vunpack.c.l.b16 %v879
      %v908 = vunpack.c.h.b16 %v879
      %v909 = vunpack.c.l.b16 %v880
      %v910 = vunpack.c.h.b16 %v880
      %v911 = vunpack.c.l.b16 %v881
      %v912 = vunpack.c.h.b16 %v881
      %v913 = vunpack.c.l.b16 %v882
      %v914 = vunpack.c.h.b16 %v882
      %v915 = vunpack.c.l.b16 %v883
      %v916 = vunpack.c.h.b16 %v883
      %v917 = vunpack.c.l.b16 %v884
      %v918 = vunpack.c.h.b16 %v884
      %v919 = vunpack.c.l.b16 %v885
      %v920 = vunpack.c.h.b16 %v885
      %v921 = vunpack.c.l.b16 %v886
      %v922 = vunpack.c.h.b16 %v886
      %v923 = vunpack.c.l.b16 %v887
      %v924 = vunpack.c.h.b16 %v887
      %v925 = vunpack.c.l.b16 %v888
      %v926 = vunpack.c.h.b16 %v888
      %v927 = vunpack.c.l.b16 %v889
      %v928 = vpack.c.b16 %v903, %v903
      %v929 = vpack.c.b16 %v904, %v904
      %v930 = vpack.c.b16 %v905, %v905
      %v931 = vpack.c.b16 %v906, %v906
      %v932 = vpack.c.b16 %v907, %v907
      %v933 = vpack.c.b16 %v908, %v908
      %v934 = vpack.c.b16 %v909, %v909
      %v935 = vpack.c.b16 %v910, %v910
      %v936 = vpack.c.b16 %v911, %v911
      %v937 = vpack.c.b16 %v912, %v912
      %v938 = vpack.c.b16 %v913, %v913
      %v939 = vpack.c.b16 %v914, %v914
      %v940 = vpack.c.b16 %v915, %v915
      %v941 = vpack.c.b16 %v916, %v916
      %v942 = vpack.c.b16 %v917, %v917
      %v943 = vpack.c.b16 %v918, %v918
      %v944 = vpack.c.b16 %v919, %v919
      %v945 = vpack.c.b16 %v920, %v920
      %v946 = vpack.c.b16 %v921, %v921
      %v947 = vpack.c.b16 %v922, %v922
      %v948 = vpack.c.b16 %v923, %v923
      %v949 = vpack.c.b16 %v924, %v924
      %v950 = vpack.c.b16 %v925, %v925
      %v951 = vpack.c.b16 %v926, %v926
      %v952 = vpack.c.b16 %v927, %v927
      %vm978 = vcmask 257024
      %979 = vst.msk [vmem:[%s170] sm:$0xf] %vm978, %v928
      %980 = vst.msk [vmem:[%s170 + $0x4] sm:$0xf] %vm978, %v929
      %981 = vst.msk [vmem:[%s170 + $0x8] sm:$0xf] %vm978, %v930
      %982 = vst.msk [vmem:[%s170 + $0xc] sm:$0xf] %vm978, %v931
      %983 = vst.msk [vmem:[%s170 + $0x10] sm:$0xf] %vm978, %v932
      %984 = vst.msk [vmem:[%s170 + $0x14] sm:$0xf] %vm978, %v933
      %985 = vst.msk [vmem:[%s170 + $0x18] sm:$0xf] %vm978, %v934
      %986 = vst.msk [vmem:[%s170 + $0x1c] sm:$0xf] %vm978, %v935
      %987 = vst.msk [vmem:[%s170 + $0x20] sm:$0xf] %vm978, %v936
      %988 = vst.msk [vmem:[%s170 + $0x24] sm:$0xf] %vm978, %v937
      %989 = vst.msk [vmem:[%s170 + $0x28] sm:$0xf] %vm978, %v938
      %990 = vst.msk [vmem:[%s170 + $0x2c] sm:$0xf] %vm978, %v939
      %991 = vst.msk [vmem:[%s170 + $0x30] sm:$0xf] %vm978, %v940
      %992 = vst.msk [vmem:[%s170 + $0x34] sm:$0xf] %vm978, %v941
      %993 = vst.msk [vmem:[%s170 + $0x38] sm:$0xf] %vm978, %v942
      %994 = vst.msk [vmem:[%s170 + $0x3c] sm:$0xf] %vm978, %v943
      %995 = vst.msk [vmem:[%s170 + $0x40] sm:$0xf] %vm978, %v944
      %996 = vst.msk [vmem:[%s170 + $0x44] sm:$0xf] %vm978, %v945
      %997 = vst.msk [vmem:[%s170 + $0x48] sm:$0xf] %vm978, %v946
      %998 = vst.msk [vmem:[%s170 + $0x4c] sm:$0xf] %vm978, %v947
      %999 = vst.msk [vmem:[%s170 + $0x50] sm:$0xf] %vm978, %v948
      %1000 = vst.msk [vmem:[%s170 + $0x54] sm:$0xf] %vm978, %v949
      %1001 = vst.msk [vmem:[%s170 + $0x58] sm:$0xf] %vm978, %v950
      %1002 = vst.msk [vmem:[%s170 + $0x5c] sm:$0xf] %vm978, %v951
      %vm1003 = vcmask 254976
      %1004 = vst.msk [vmem:[%s170 + $0x60] sm:$0x3] %vm1003, %v952
      %p1005 = scmp.lt.s32.totalorder %s14, 1
      %s1006 = scalar_select %p1005, %s14, 1
      %s1007 = smul.addr %s1006, 25
      %s1008 = smul.addr %s1007, 4
      %s1009 = scalar_lea.vmem %s3, %s1008
      // Predicated region
      $region33: #{net_forward.2} parent=31 // pred_check
        %p1010 = pneg %p100
      $region34: #{net_forward.2} parent=31 // pred_check_branch
        %1012 = sbr.rel (%p1010) target = $region36
      $region35: #{net_forward.2} parent=31 // pred_region
        _
      $region36: #{net_forward.2} parent=31 // pred_fallthru
        _
    $region32: #{net_forward.2} parent=5 // pred_fallthru
      _
    %p1013 = scmp.le.s32.totalorder 2, %s9
    // Predicated region
    $region37: #{net_forward.2} parent=5 // pred_check
      %p1014 = pneg %p1013
    $region38: #{net_forward.2} parent=5 // pred_check_branch
      %1016 = sbr.rel (%p1014) target = $region40
    $region39: #{net_forward.2} parent=5 // pred_region
      %s1017 = ssub.s32 %s9, 2
      // Predicated region
      $region41: #{net_forward.2} parent=39 // pred_check
        %p1018 = pneg %p106
      $region42: #{net_forward.2} parent=39 // pred_check_branch
        %1020 = sbr.rel (%p1018) target = $region44
      $region43: #{net_forward.2} parent=39 // pred_region
        %p1021 = scmp.lt.s32.totalorder %s15, 1
        %s1022 = scalar_select %p1021, %s15, 1
        %s1023 = smul.addr %s1022, 25
        %s1024 = smul.addr %s1023, 4
        %s1025 = scalar_lea.vmem %s3, %s1024
      $region44: #{net_forward.2} parent=39 // pred_fallthru
        _
    $region40: #{net_forward.2} parent=5 // pred_fallthru
      _
  $region6: #{net_forward.2} parent=0 // loop_footer
    %s13 = sadd.s32 1, %s9
  $region7: #{net_forward.2} parent=0 // loop_footer_branch
    %8 = sbr.rel target = $region3
  $region8: #{net_forward.2} parent=0 // loop_exit
    _

// kernel: net_forward.3
$region0: #{net_forward.3}
  #allocation0 [shape = 'u32[]', space=smem, size = 0x4, offset = 0x4, fixed_abs, tag = 'smem constant byte address 0x4 - core index']
  #allocation1 [shape = 'u32[144,128]{1,0:T(1,128)}', space=vmem, size = 0x12000, scoped, tag = 'internal scratch']
  #allocation2 [shape = 'f32[1,400]{1,0:T(1,128)}', space=vmem, size = 0x800, scoped, tag = 'scratch operand']
  %s0 = inlined_call_operand.vmem [shape: bf16[2,25,216], index: 0, kind: input, shape index: {}]
  %s1 = inlined_call_operand.vmem [shape: bf16[216,128], index: 1, kind: input, shape index: {}]
  %s2 = inlined_call_operand.vmem [shape: f32[1,32], index: 2, kind: input, shape index: {}]
  %s3 = inlined_call_operand.vmem [shape: bf16[400,128], index: 3, kind: input, shape index: {}]
  %s4 = inlined_call_operand.vmem [shape: f32[1,128], index: 4, kind: input, shape index: {}]
  %s5 = inlined_call_operand.vmem [shape: bf16[128,128], index: 5, kind: input, shape index: {}]
  %s6 = inlined_call_operand.vmem [shape: f32[1,128], index: 6, kind: input, shape index: {}]
  %s7 = inlined_call_operand.vmem [shape: bf16[128,128], index: 7, kind: input, shape index: {}]
  %s8 = inlined_call_operand.vmem [shape: f32[1,128], index: 8, kind: input, shape index: {}]
  %s9 = inlined_call_operand.hbm [shape: f32[2,1,128], index: 9, kind: output, shape index: {}]
  %s10 = sld [smem:[#allocation0]]
  $region69: #{net_forward.3} parent=0
    _
  %s12 = ssub.s32 1, %s10
  %s13 = scalar_select 0, %s12, %s10
  $region1: #{net_forward.3} parent=0
    #allocation3 [shape = 'u8[1024]{0}', space=vmem, size = 0x400, scoped, tag = 'output window, operand 0']
    #allocation4 [shape = 's32[2]{0}', space=sflag, size = 0x8, scoped, tag = 'scoped memory for net_forward.3']
    %14 = vsyncpa [#allocation4], 0
    %s15 = scalar_lea.sflag [#allocation4], 1
    %16 = vsyncpa %s15, 0
    loop: start=0, step=1, limit=4
    $region2: #{net_forward.3} parent=1 // loop_pre_header
      _
    $region3: #{net_forward.3} parent=1 // loop_header
      %s18 = sphi 0, %s22
      %p19 = scmp.ge.s32.totalorder %s18, 4
      %s28 = sphi 0, %s30
      %s31 = sphi 0, %s28
      %s32 = sphi 0, %s31
      %s48 = sphi 0, %s32
      %s52 = sphi 0, %s52
      %s54 = sphi 0, %s52
      %s55 = sphi 0, %s54
      %s69 = sphi 0, %s55
      %s73 = sphi 0, %s73
      %s75 = sphi 0, %s73
      %s76 = sphi 0, %s75
      %s90 = sphi 0, %s76
      %s94 = sphi 0, %s94
      %s96 = sphi 0, %s94
      %s97 = sphi 0, %s96
      %s111 = sphi 0, %s97
      %s115 = sphi 0, %s115
      %s117 = sphi 0, %s115
      %s118 = sphi 0, %s117
      %s132 = sphi 0, %s118
      %s136 = sphi 0, %s136
      %s138 = sphi 0, %s136
      %s139 = sphi 0, %s138
      %s153 = sphi 0, %s139
      %s157 = sphi 0, %s157
      %s159 = sphi 0, %s157
      %s160 = sphi 0, %s159
      %s174 = sphi 0, %s160
      %s178 = sphi 0, %s178
      %s180 = sphi 0, %s178
      %s181 = sphi 0, %s180
      %s195 = sphi 0, %s181
      %s199 = sphi 0, %s199
      %s201 = sphi 0, %s199
      %s202 = sphi 0, %s201
      %s216 = sphi 0, %s202
      %s222 = sphi 0, %s224
      %s225 = sphi 0, %s222
      %s226 = sphi 0, %s225
      %s242 = sphi 0, %s226
    $region4: #{net_forward.3} parent=1 // loop_header_branch
      %21 = sbr.rel (%p19) target = $region8
    $region5: #{net_forward.3} parent=1 // loop_body
      %s23 = ssub.s32 %s18, 1
      %s24 = ssub.s32 %s18, 2
      %s25 = sadd.s32 %s18, 1
      %s26 = ssub.s32 %s18, %s25
      %p27 = scmp.eq.s32.totalorder %s26, 0
      %s29 = sadd.s32 %s28, 1
      %s30 = scalar_select %p27, %s28, %s29
      %p33 = pneg %p27
      %p34 = scmp.eq.s32.totalorder %s18, 1
      %p35 = por %p33, %p34
      %p36 = scmp.ne.s32.totalorder %s28, %s31
      %p37 = scmp.eq.s32.totalorder %s18, 0
      %p38 = por %p36, %p37
      %p39 = scmp.ne.s32.totalorder %s28, %s31
      %p40 = scmp.eq.s32.totalorder %s23, 1
      %p41 = por %p39, %p40
      %p42 = scmp.ne.s32.totalorder %s31, %s32
      %p43 = scmp.eq.s32.totalorder %s23, 0
      %p44 = por %p42, %p43
      %p45 = scmp.ne.s32.totalorder %s31, %s32
      %p46 = scmp.eq.s32.totalorder %s24, 1
      %p47 = por %p45, %p46
      %p49 = scmp.ne.s32.totalorder %s32, %s48
      %p50 = scmp.eq.s32.totalorder %s24, 0
      %p51 = por %p49, %p50
      %s53 = sadd.s32 %s52, 1
      %p56 = scmp.eq.s32.totalorder %s18, 1
      %p57 = scmp.ne.s32.totalorder %s52, %s54
      %p58 = scmp.eq.s32.totalorder %s18, 0
      %p59 = por %p57, %p58
      %p60 = scmp.ne.s32.totalorder %s52, %s54
      %p61 = scmp.eq.s32.totalorder %s23, 1
      %p62 = por %p60, %p61
      %p63 = scmp.ne.s32.totalorder %s54, %s55
      %p64 = scmp.eq.s32.totalorder %s23, 0
      %p65 = por %p63, %p64
      %p66 = scmp.ne.s32.totalorder %s54, %s55
      %p67 = scmp.eq.s32.totalorder %s24, 1
      %p68 = por %p66, %p67
      %p70 = scmp.ne.s32.totalorder %s55, %s69
      %p71 = scmp.eq.s32.totalorder %s24, 0
      %p72 = por %p70, %p71
      %s74 = sadd.s32 %s73, 1
      %p77 = scmp.eq.s32.totalorder %s18, 1
      %p78 = scmp.ne.s32.totalorder %s73, %s75
      %p79 = scmp.eq.s32.totalorder %s18, 0
      %p80 = por %p78, %p79
      %p81 = scmp.ne.s32.totalorder %s73, %s75
      %p82 = scmp.eq.s32.totalorder %s23, 1
      %p83 = por %p81, %p82
      %p84 = scmp.ne.s32.totalorder %s75, %s76
      %p85 = scmp.eq.s32.totalorder %s23, 0
      %p86 = por %p84, %p85
      %p87 = scmp.ne.s32.totalorder %s75, %s76
      %p88 = scmp.eq.s32.totalorder %s24, 1
      %p89 = por %p87, %p88
      %p91 = scmp.ne.s32.totalorder %s76, %s90
      %p92 = scmp.eq.s32.totalorder %s24, 0
      %p93 = por %p91, %p92
      %s95 = sadd.s32 %s94, 1
      %p98 = scmp.eq.s32.totalorder %s18, 1
      %p99 = scmp.ne.s32.totalorder %s94, %s96
      %p100 = scmp.eq.s32.totalorder %s18, 0
      %p101 = por %p99, %p100
      %p102 = scmp.ne.s32.totalorder %s94, %s96
      %p103 = scmp.eq.s32.totalorder %s23, 1
      %p104 = por %p102, %p103
      %p105 = scmp.ne.s32.totalorder %s96, %s97
      %p106 = scmp.eq.s32.totalorder %s23, 0
      %p107 = por %p105, %p106
      %p108 = scmp.ne.s32.totalorder %s96, %s97
      %p109 = scmp.eq.s32.totalorder %s24, 1
      %p110 = por %p108, %p109
      %p112 = scmp.ne.s32.totalorder %s97, %s111
      %p113 = scmp.eq.s32.totalorder %s24, 0
      %p114 = por %p112, %p113
      %s116 = sadd.s32 %s115, 1
      %p119 = scmp.eq.s32.totalorder %s18, 1
      %p120 = scmp.ne.s32.totalorder %s115, %s117
      %p121 = scmp.eq.s32.totalorder %s18, 0
      %p122 = por %p120, %p121
      %p123 = scmp.ne.s32.totalorder %s115, %s117
      %p124 = scmp.eq.s32.totalorder %s23, 1
      %p125 = por %p123, %p124
      %p126 = scmp.ne.s32.totalorder %s117, %s118
      %p127 = scmp.eq.s32.totalorder %s23, 0
      %p128 = por %p126, %p127
      %p129 = scmp.ne.s32.totalorder %s117, %s118
      %p130 = scmp.eq.s32.totalorder %s24, 1
      %p131 = por %p129, %p130
      %p133 = scmp.ne.s32.totalorder %s118, %s132
      %p134 = scmp.eq.s32.totalorder %s24, 0
      %p135 = por %p133, %p134
      %s137 = sadd.s32 %s136, 1
      %p140 = scmp.eq.s32.totalorder %s18, 1
      %p141 = scmp.ne.s32.totalorder %s136, %s138
      %p142 = scmp.eq.s32.totalorder %s18, 0
      %p143 = por %p141, %p142
      %p144 = scmp.ne.s32.totalorder %s136, %s138
      %p145 = scmp.eq.s32.totalorder %s23, 1
      %p146 = por %p144, %p145
      %p147 = scmp.ne.s32.totalorder %s138, %s139
      %p148 = scmp.eq.s32.totalorder %s23, 0
      %p149 = por %p147, %p148
      %p150 = scmp.ne.s32.totalorder %s138, %s139
      %p151 = scmp.eq.s32.totalorder %s24, 1
      %p152 = por %p150, %p151
      %p154 = scmp.ne.s32.totalorder %s139, %s153
      %p155 = scmp.eq.s32.totalorder %s24, 0
      %p156 = por %p154, %p155
      %s158 = sadd.s32 %s157, 1
      %p161 = scmp.eq.s32.totalorder %s18, 1
      %p162 = scmp.ne.s32.totalorder %s157, %s159
      %p163 = scmp.eq.s32.totalorder %s18, 0
      %p164 = por %p162, %p163
      %p165 = scmp.ne.s32.totalorder %s157, %s159
      %p166 = scmp.eq.s32.totalorder %s23, 1
      %p167 = por %p165, %p166
      %p168 = scmp.ne.s32.totalorder %s159, %s160
      %p169 = scmp.eq.s32.totalorder %s23, 0
      %p170 = por %p168, %p169
      %p171 = scmp.ne.s32.totalorder %s159, %s160
      %p172 = scmp.eq.s32.totalorder %s24, 1
      %p173 = por %p171, %p172
      %p175 = scmp.ne.s32.totalorder %s160, %s174
      %p176 = scmp.eq.s32.totalorder %s24, 0
      %p177 = por %p175, %p176
      %s179 = sadd.s32 %s178, 1
      %p182 = scmp.eq.s32.totalorder %s18, 1
      %p183 = scmp.ne.s32.totalorder %s178, %s180
      %p184 = scmp.eq.s32.totalorder %s18, 0
      %p185 = por %p183, %p184
      %p186 = scmp.ne.s32.totalorder %s178, %s180
      %p187 = scmp.eq.s32.totalorder %s23, 1
      %p188 = por %p186, %p187
      %p189 = scmp.ne.s32.totalorder %s180, %s181
      %p190 = scmp.eq.s32.totalorder %s23, 0
      %p191 = por %p189, %p190
      %p192 = scmp.ne.s32.totalorder %s180, %s181
      %p193 = scmp.eq.s32.totalorder %s24, 1
      %p194 = por %p192, %p193
      %p196 = scmp.ne.s32.totalorder %s181, %s195
      %p197 = scmp.eq.s32.totalorder %s24, 0
      %p198 = por %p196, %p197
      %s200 = sadd.s32 %s199, 1
      %p203 = scmp.eq.s32.totalorder %s18, 1
      %p204 = scmp.ne.s32.totalorder %s199, %s201
      %p205 = scmp.eq.s32.totalorder %s18, 0
      %p206 = por %p204, %p205
      %p207 = scmp.ne.s32.totalorder %s199, %s201
      %p208 = scmp.eq.s32.totalorder %s23, 1
      %p209 = por %p207, %p208
      %p210 = scmp.ne.s32.totalorder %s201, %s202
      %p211 = scmp.eq.s32.totalorder %s23, 0
      %p212 = por %p210, %p211
      %p213 = scmp.ne.s32.totalorder %s201, %s202
      %p214 = scmp.eq.s32.totalorder %s24, 1
      %p215 = por %p213, %p214
      %p217 = scmp.ne.s32.totalorder %s202, %s216
      %p218 = scmp.eq.s32.totalorder %s24, 0
      %p219 = por %p217, %p218
      %s220 = ssub.s32 %s18, %s25
      %p221 = scmp.eq.s32.totalorder %s220, 0
      %s223 = sadd.s32 %s222, 1
      %s224 = scalar_select %p221, %s222, %s223
      %p227 = pneg %p221
      %p228 = scmp.eq.s32.totalorder %s18, 1
      %p229 = por %p227, %p228
      %p230 = scmp.ne.s32.totalorder %s222, %s225
      %p231 = scmp.eq.s32.totalorder %s18, 0
      %p232 = por %p230, %p231
      %p233 = scmp.ne.s32.totalorder %s222, %s225
      %p234 = scmp.eq.s32.totalorder %s23, 1
      %p235 = por %p233, %p234
      %p236 = scmp.ne.s32.totalorder %s225, %s226
      %p237 = scmp.eq.s32.totalorder %s23, 0
      %p238 = por %p236, %p237
      %p239 = scmp.ne.s32.totalorder %s225, %s226
      %p240 = scmp.eq.s32.totalorder %s24, 1
      %p241 = por %p239, %p240
      %p243 = scmp.ne.s32.totalorder %s226, %s242
      %p244 = scmp.eq.s32.totalorder %s24, 0
      %p245 = por %p243, %p244
      %p246 = scmp.le.s32.totalorder 1, %s18
      %p247 = scmp.lt.s32.totalorder %s18, 3
      %p248 = pnand %p246, %p247
      %p249 = pneg %p248
      // Predicated region
      $region9: #{net_forward.3} parent=5 // pred_check
        _
      $region10: #{net_forward.3} parent=5 // pred_check_branch
        %251 = sbr.rel (%p248) target = $region12
      $region11: #{net_forward.3} parent=5 // pred_region
        %s252 = ssub.s32 %s18, 1
        // Predicated region
        $region13: #{net_forward.3} parent=11 // pred_check
          %p253 = pneg %p65
        $region14: #{net_forward.3} parent=11 // pred_check_branch
          %255 = sbr.rel (%p253) target = $region16
        $region15: #{net_forward.3} parent=11 // pred_region
          _
        $region16: #{net_forward.3} parent=11 // pred_fallthru
          _
        // Predicated region
        $region17: #{net_forward.3} parent=11 // pred_check
          %p256 = pneg %p86
        $region18: #{net_forward.3} parent=11 // pred_check_branch
          %258 = sbr.rel (%p256) target = $region20
        $region19: #{net_forward.3} parent=11 // pred_region
          _
        $region20: #{net_forward.3} parent=11 // pred_fallthru
          _
        // Predicated region
        $region21: #{net_forward.3} parent=11 // pred_check
          %p259 = pneg %p107
        $region22: #{net_forward.3} parent=11 // pred_check_branch
          %261 = sbr.rel (%p259) target = $region24
        $region23: #{net_forward.3} parent=11 // pred_region
          _
        $region24: #{net_forward.3} parent=11 // pred_fallthru
          _
        // Predicated region
        $region25: #{net_forward.3} parent=11 // pred_check
          %p262 = pneg %p128
        $region26: #{net_forward.3} parent=11 // pred_check_branch
          %264 = sbr.rel (%p262) target = $region28
        $region27: #{net_forward.3} parent=11 // pred_region
          _
        $region28: #{net_forward.3} parent=11 // pred_fallthru
          _
        // Predicated region
        $region29: #{net_forward.3} parent=11 // pred_check
          %p265 = pneg %p149
        $region30: #{net_forward.3} parent=11 // pred_check_branch
          %267 = sbr.rel (%p265) target = $region32
        $region31: #{net_forward.3} parent=11 // pred_region
          _
        $region32: #{net_forward.3} parent=11 // pred_fallthru
          _
        // Predicated region
        $region33: #{net_forward.3} parent=11 // pred_check
          %p268 = pneg %p170
        $region34: #{net_forward.3} parent=11 // pred_check_branch
          %270 = sbr.rel (%p268) target = $region36
        $region35: #{net_forward.3} parent=11 // pred_region
          _
        $region36: #{net_forward.3} parent=11 // pred_fallthru
          _
        // Predicated region
        $region37: #{net_forward.3} parent=11 // pred_check
          %p271 = pneg %p191
        $region38: #{net_forward.3} parent=11 // pred_check_branch
          %273 = sbr.rel (%p271) target = $region40
        $region39: #{net_forward.3} parent=11 // pred_region
          _
        $region40: #{net_forward.3} parent=11 // pred_fallthru
          _
        // Predicated region
        $region41: #{net_forward.3} parent=11 // pred_check
          %p274 = pneg %p212
        $region42: #{net_forward.3} parent=11 // pred_check_branch
          %276 = sbr.rel (%p274) target = $region44
        $region43: #{net_forward.3} parent=11 // pred_region
          _
        $region44: #{net_forward.3} parent=11 // pred_fallthru
          _
      $region12: #{net_forward.3} parent=5 // pred_fallthru
        _
      %p277 = scmp.lt.s32.totalorder %s18, 2
      // Predicated region
      $region45: #{net_forward.3} parent=5 // pred_check
        %p278 = pneg %p277
      $region46: #{net_forward.3} parent=5 // pred_check_branch
        %280 = sbr.rel (%p278) target = $region48
      $region47: #{net_forward.3} parent=5 // pred_region
        // Predicated region
        $region49: #{net_forward.3} parent=47 // pred_check
          %p281 = pneg %p38
        $region50: #{net_forward.3} parent=47 // pred_check_branch
          %283 = sbr.rel (%p281) target = $region52
        $region51: #{net_forward.3} parent=47 // pred_region
          %p284 = scmp.lt.s32.totalorder %s18, 1
          %s285 = scalar_select %p284, %s18, 1
          %s286 = smul.addr %s285, 8
          %s287 = smul.addr %s286, 4
          %s288 = scalar_lea.vmem %s0, %s287
        $region52: #{net_forward.3} parent=47 // pred_fallthru
          _
      $region48: #{net_forward.3} parent=5 // pred_fallthru
        _
      %p289 = scmp.le.s32.totalorder 1, %s18
      %p290 = scmp.lt.s32.totalorder %s18, 3
      %p291 = pnand %p289, %p290
      %p292 = pneg %p291
      // Predicated region
      $region53: #{net_forward.3} parent=5 // pred_check
        _
      $region54: #{net_forward.3} parent=5 // pred_check_branch
        %294 = sbr.rel (%p291) target = $region56
      $region55: #{net_forward.3} parent=5 // pred_region
        %s295 = ssub.s32 %s18, 1
        %p296 = scmp.lt.s32.totalorder %s23, 1
        %s297 = scalar_select %p296, %s23, 1
        %s298 = smul.addr %s297, 8
        %s299 = smul.addr %s298, 4
        %s300 = scalar_lea.vmem %s0, %s299
        %p301 = pneg %p44
        %p302 = pneg %p41
        %p303 = pneg %p65
        %p304 = pneg %p62
        %p305 = pneg %p86
        %p306 = pneg %p83
        %p307 = pneg %p107
        %p308 = pneg %p104
        %p309 = pneg %p128
        %p310 = pneg %p125
        %p311 = pneg %p149
        %p312 = pneg %p146
        %p313 = pneg %p170
        %p314 = pneg %p167
        %p315 = pneg %p191
        %p316 = pneg %p188
        %p317 = pneg %p212
        %p318 = pneg %p209
        %p319 = pneg %p238
        %p320 = pneg %p235
        %s321 = sand.u32 %s225, 1
        %s322 = scalar_lea.sflag [#allocation4], %s321
        %s323 = sand.u32 %s225, 1
        %s324 = scalar_lea.vmem [#allocation3], %s323
        %p325 = scmp.lt.s32.totalorder %s23, 1
        %s326 = scalar_select %p325, %s23, 1
        %s327 = smul.addr %s326, 8
        %s328 = smul.addr %s327, 4
        %s329 = scalar_lea.vmem %s0, %s328
        %v331 = vld [vmem:[%s329] sm:$0xff]
        %v332 = vld [vmem:[%s329 + $0x8] sm:$0xff]
        %v333 = vld [vmem:[%s329 + $0x10] sm:$0xff]
        %v334 = vld [vmem:[%s329 + $0x18] sm:$0x11]
        %v335 = vld [vmem:[%s1] sm:$0xf]
        %v336 = vld [vmem:[%s1 + $0x4] sm:$0xf]
        %v337 = vld [vmem:[%s1 + $0x8] sm:$0xf]
        %v338 = vld [vmem:[%s1 + $0xc] sm:$0xf]
        %v339 = vld [vmem:[%s1 + $0x10] sm:$0xf]
        %v340 = vld [vmem:[%s1 + $0x14] sm:$0xf]
        %v341 = vld [vmem:[%s1 + $0x18] sm:$0xf]
        %v342 = vld [vmem:[%s1 + $0x1c] sm:$0xf]
        %v343 = vld [vmem:[%s1 + $0x20] sm:$0xf]
        %v344 = vld [vmem:[%s1 + $0x24] sm:$0xf]
        %v345 = vld [vmem:[%s1 + $0x28] sm:$0xf]
        %v346 = vld [vmem:[%s1 + $0x2c] sm:$0xf]
        %v347 = vld [vmem:[%s1 + $0x30] sm:$0xf]
        %v348 = vld [vmem:[%s1 + $0x34] sm:$0xf]
        %v349 = vld [vmem:[%s1 + $0x38] sm:$0xf]
        %v350 = vld [vmem:[%s1 + $0x3c] sm:$0xf]
        %v351 = vld [vmem:[%s1 + $0x40] sm:$0xf]
        %v352 = vld [vmem:[%s1 + $0x44] sm:$0xf]
        %v353 = vld [vmem:[%s1 + $0x48] sm:$0xf]
        %v354 = vld [vmem:[%s1 + $0x4c] sm:$0xf]
        %v355 = vld [vmem:[%s1 + $0x50] sm:$0xf]
        %v356 = vld [vmem:[%s1 + $0x54] sm:$0xf]
        %v357 = vld [vmem:[%s1 + $0x58] sm:$0xf]
        %v358 = vld [vmem:[%s1 + $0x5c] sm:$0xf]
        %v359 = vld [vmem:[%s1 + $0x60] sm:$0xf]
        %v360 = vld [vmem:[%s1 + $0x64] sm:$0xf]
        %v361 = vld [vmem:[%s1 + $0x68] sm:$0xf]
        %v366 = vunpack.c.l.b16 %v331
        %v367 = vunpack.c.h.b16 %v331
        %v368 = vunpack.c.l.b16 %v332
        %v369 = vunpack.c.h.b16 %v332
        %v370 = vunpack.c.l.b16 %v333
        %v371 = vunpack.c.h.b16 %v333
        %v372 = vunpack.c.l.b16 %v334
        %v373 = vunpack.c.h.b16 %v334
        %v374 = vpack.c.b16 %v368, %v366
        %v375 = vpack.c.b16 %v369, %v367
        %v376 = vpack.c.b16 %v372, %v370
        %v377 = vpack.c.b16 %v373, %v371
        %v407 = vunpack.c.l.b16 %v335
        %v408 = vunpack.c.l.b16 %v336
        %v409 = vunpack.c.l.b16 %v337
        %v410 = vunpack.c.l.b16 %v338
        %v411 = vunpack.c.l.b16 %v339
        %v412 = vunpack.c.l.b16 %v340
        %v413 = vunpack.c.l.b16 %v341
        %v414 = vunpack.c.l.b16 %v342
        %v415 = vunpack.c.l.b16 %v343
        %v416 = vunpack.c.l.b16 %v344
        %v417 = vunpack.c.l.b16 %v345
        %v418 = vunpack.c.l.b16 %v346
        %v419 = vunpack.c.l.b16 %v347
        %v420 = vunpack.c.l.b16 %v348
        %v421 = vunpack.c.l.b16 %v349
        %v422 = vunpack.c.l.b16 %v350
        %v423 = vunpack.c.l.b16 %v351
        %v424 = vunpack.c.l.b16 %v352
        %v425 = vunpack.c.l.b16 %v353
        %v426 = vunpack.c.l.b16 %v354
        %v427 = vunpack.c.l.b16 %v355
        %v428 = vunpack.c.l.b16 %v356
        %v429 = vunpack.c.l.b16 %v357
        %v430 = vunpack.c.l.b16 %v358
        %v431 = vunpack.c.l.b16 %v359
        %v432 = vunpack.c.l.b16 %v360
        %v433 = vunpack.c.l.b16 %v361
        %v434 = vpack.c.b16 %v408, %v407
        %v435 = vpack.c.b16 %v410, %v409
        %v436 = vpack.c.b16 %v412, %v411
        %v437 = vpack.c.b16 %v414, %v413
        %v438 = vpack.c.b16 %v416, %v415
        %v439 = vpack.c.b16 %v418, %v417
        %v440 = vpack.c.b16 %v420, %v419
        %v441 = vpack.c.b16 %v422, %v421
        %v442 = vpack.c.b16 %v424, %v423
        %v443 = vpack.c.b16 %v426, %v425
        %v444 = vpack.c.b16 %v428, %v427
        %v445 = vpack.c.b16 %v430, %v429
        %v446 = vpack.c.b16 %v432, %v431
        %v447 = vpack.c.b16 %v433, %v433
        %vm461 = vcmask 719872
        %v463 = vsel %vm461, %v375, 0
        %v466 = vsel %vm461, %v377, 0
        %vm468 = vcmask 1043456
        %v470 = vsel %vm468, %v447, 0
        %472 = vmatprep.subr.bf16.mxu0 0
        %473 = vmatpush1.bf16.msra.mxu0 %v434
        %474 = vmatprep.subr.bf16.mxu0 0
        %475 = vmatpush1.bf16.msra.mxu0 %v435
        %476 = vmatprep.subr.bf16.mxu0 0
        %477 = vmatpush1.bf16.msra.mxu0 %v436
        %478 = vmatprep.subr.bf16.mxu0 0
        %479 = vmatpush1.bf16.msra.mxu0 %v437
        %480 = vmatprep.subr.bf16.mxu0 0
        %481 = vmatpush1.bf16.msra.mxu0 %v438
        %482 = vmatprep.subr.bf16.mxu0 0
        %483 = vmatpush1.bf16.msra.mxu0 %v439
        %484 = vmatprep.subr.bf16.mxu0 0
        %485 = vmatpush1.bf16.msra.mxu0 %v440
        %486 = vmatprep.subr.bf16.mxu0 0
        %487 = vmatpush1.bf16.msra.mxu0 %v441
        %488 = vmatprep.subr.bf16.mxu0 0
        %489 = vmatpush1.bf16.msra.mxu0 %v442
        %490 = vmatprep.subr.bf16.mxu0 0
        %491 = vmatpush1.bf16.msra.mxu0 %v443
        %492 = vmatprep.subr.bf16.mxu0 0
        %493 = vmatpush1.bf16.msra.mxu0 %v444
        %494 = vmatprep.subr.bf16.mxu0 0
        %495 = vmatpush1.bf16.msra.mxu0 %v445
        %496 = vmatprep.subr.bf16.mxu0 0
        %497 = vmatpush1.bf16.msra.mxu0 %v446
        %498 = vmatprep.subr.bf16.mxu0 0
        %499 = vmatpush1.bf16.msra.mxu0 %v470
        %500 = vmatprep.subr.bf16.mxu0 0
        %501 = vmatpush1.bf16.msra.mxu0 0
        %502 = vmatprep.subr.bf16.mxu0 0
        %503 = vmatpush1.bf16.msra.mxu0 0
        %504 = vmatprep.mubr.bf16.mxu0 %v463
        %505 = vmatmul.mubr.bf16.gmra.mrb[0].mxu0 %v374
        %v506 = vpop.f32.mrb[0].mxu0
        %v507 = vadd.f32 0.0, %v506
        %v508 = vpop.f32.mrb[0].mxu0
        %v509 = vpop.f32.mrb[0].mxu0
        %v510 = vadd.f32 0.0, %v509
        %v511 = vpop.f32.mrb[0].mxu0
        %512 = vmatprep.mubr.bf16.mxu0 %v466
        %513 = vmatmul.mubr.bf16.gmra.mrb[0].mxu0 %v376
        %v514 = vpop.f32.mrb[0].mxu0
        %v515 = vadd.f32 0.0, %v514
        %v516 = vpop.f32.mrb[0].mxu0
        %v517 = vpop.f32.mrb[0].mxu0
        %v518 = vadd.f32 0.0, %v517
        %v519 = vpop.f32.mrb[0].mxu0
        %520 = vdwg.mxu0
        %525 = vrot.lane.b32.xlu0 %v507, 96
        %v526 = vpop.permute.xlu0 %525
        %527 = vrot.lane.b32.xlu0 %v510, 96
        %v528 = vpop.permute.xlu0 %527
        %529 = vrot.lane.b32.xlu0 %v515, 96
        %v530 = vpop.permute.xlu0 %529
        %531 = vrot.lane.b32.xlu0 %v518, 96
        %v532 = vpop.permute.xlu0 %531
        %v537 = vmax.f32 %v507, %v526
        %v538 = vmax.f32 %v510, %v528
        %v539 = vmax.f32 %v515, %v530
        %v540 = vmax.f32 %v518, %v532
        %541 = vrot.lane.b32.xlu0 %v507, 64
        %v542 = vpop.permute.xlu0 %541
        %543 = vrot.lane.b32.xlu0 %v510, 64
        %v544 = vpop.permute.xlu0 %543
        %545 = vrot.lane.b32.xlu0 %v515, 64
        %v546 = vpop.permute.xlu0 %545
        %547 = vrot.lane.b32.xlu0 %v518, 64
        %v548 = vpop.permute.xlu0 %547
        %v553 = vmax.f32 %v537, %v542
        %v554 = vmax.f32 %v538, %v544
        %v555 = vmax.f32 %v539, %v546
        %v556 = vmax.f32 %v540, %v548
        %557 = vrot.lane.b32.xlu0 %v507, 32
        %v558 = vpop.permute.xlu0 %557
        %559 = vrot.lane.b32.xlu0 %v510, 32
        %v560 = vpop.permute.xlu0 %559
        %561 = vrot.lane.b32.xlu0 %v515, 32
        %v562 = vpop.permute.xlu0 %561
        %563 = vrot.lane.b32.xlu0 %v518, 32
        %v564 = vpop.permute.xlu0 %563
        %v569 = vmax.f32 %v553, %v558
        %v570 = vmax.f32 %v554, %v560
        %v571 = vmax.f32 %v555, %v562
        %v572 = vmax.f32 %v556, %v564
        %v573 = vld [vmem:[%s2] sm:$0x1]
        %v575 = vlaneseq
        %v576 = vshrl.u32 %v575, 7
        %v577 = vsub.s32 0, %v576
        %v578 = vrot.slane %v573, %v577
        %v580 = vadd.f32 %v569, %v578
        %v581 = vadd.f32 %v570, %v578
        %v582 = vadd.f32 %v571, %v578
        %v583 = vadd.f32 %v572, %v578
        %v584 = vmax.f32 %v580, 0.0
        %v585 = vmax.f32 %v581, 0.0
        %v586 = vmax.f32 %v582, 0.0
        %v587 = vmax.f32 %v583, 0.0
        %v588 = vlaneseq
        %vm589 = vcmp.ge.s32.totalorder %v588, 0
        %vm590 = vcmp.lt.s32.totalorder %v588, 16
        %vm591 = vmand %vm589, %vm590
        %592 = vst.msk [vmem:[#allocation2] sm:$0x1] %vm591, %v584
        %v595 = vunpack.c.l.s4 1966171168
        %v596 = vunpack.c.0.s8 %v595
        %v597 = vlaneseq
        %v598 = vshrl.u32 %v597, 7
        %v599 = vsub.s32 %v596, %v598
        %v600 = vrot.slane %v584, %v599
        %v601 = vcombine.high %v600, %v600
        %v603 = vunpack.c.l.s4 1966171168
        %v604 = vunpack.c.0.s8 %v603
        %v605 = vlaneseq
        %v606 = vshrl.u32 %v605, 7
        %v607 = vsub.s32 %v604, %v606
        %v608 = vrot.slane %v600, %v607
        %v610 = vunpack.c.l.s4 1966171168
        %v611 = vunpack.c.0.s8 %v610
        %v612 = vlaneseq
        %v613 = vshrl.u32 %v612, 7
        %v614 = vsub.s32 %v611, %v613
        %v615 = vrot.slane %v601, %v614
        %616 = vrot.lane.b32.xlu0 %v615, 16
        %v617 = vpop.permute.xlu0 %616
        %vm619 = vcmp.ge.s32.totalorder %v588, 16
        %vm620 = vcmp.lt.s32.totalorder %v588, 32
        %vm621 = vmand %vm619, %vm620
        %622 = vst.msk [vmem:[#allocation2] sm:$0x1] %vm621, %v617
        %v623 = vcombine.high %v608, %v608
        %624 = vrot.lane.b32.xlu0 %v623, 32
        %v625 = vpop.permute.xlu0 %624
        %vm627 = vcmp.ge.s32.totalorder %v588, 32
        %vm628 = vcmp.lt.s32.totalorder %v588, 48
        %vm629 = vmand %vm627, %vm628
        %630 = vst.msk [vmem:[#allocation2] sm:$0x1] %vm629, %v625
        %v631 = vcombine.high %v615, %v615
        %632 = vrot.lane.b32.xlu0 %v631, 48
        %v633 = vpop.permute.xlu0 %632
        %vm635 = vcmp.ge.s32.totalorder %v588, 48
        %vm636 = vcmp.lt.s32.totalorder %v588, 64
        %vm637 = vmand %vm635, %vm636
        %638 = vst.msk [vmem:[#allocation2] sm:$0x1] %vm637, %v633
        %v639 = vcombine.high %v584, %v584
        %v641 = vunpack.c.l.s4 1966171168
        %v642 = vunpack.c.0.s8 %v641
        %v643 = vlaneseq
        %v644 = vshrl.u32 %v643, 7
        %v645 = vsub.s32 %v642, %v644
        %v646 = vrot.slane %v639, %v645
        %v648 = vunpack.c.l.s4 1966171168
        %v649 = vunpack.c.0.s8 %v648
        %v650 = vlaneseq
        %v651 = vshrl.u32 %v650, 7
        %v652 = vsub.s32 %v649, %v651
        %v653 = vrot.slane %v646, %v652
        %654 = vrot.lane.b32.xlu0 %v653, 64
        %v655 = vpop.permute.xlu0 %654
        %vm657 = vcmp.ge.s32.totalorder %v588, 64
        %vm658 = vcmp.lt.s32.totalorder %v588, 80
        %vm659 = vmand %vm657, %vm658
        %660 = vst.msk [vmem:[#allocation2] sm:$0x1] %vm659, %v655
        %v661 = vcombine.high %v646, %v646
        %v663 = vunpack.c.l.s4 1966171168
        %v664 = vunpack.c.0.s8 %v663
        %v665 = vlaneseq
        %v666 = vshrl.u32 %v665, 7
        %v667 = vsub.s32 %v664, %v666
        %v668 = vrot.slane %v661, %v667
        %669 = vrot.lane.b32.xlu0 %v668, 80
        %v670 = vpop.permute.xlu0 %669
        %vm672 = vcmp.ge.s32.totalorder %v588, 80
        %vm673 = vcmp.lt.s32.totalorder %v588, 96
        %vm674 = vmand %vm672, %vm673
        %675 = vst.msk [vmem:[#allocation2] sm:$0x1] %vm674, %v670
        %v676 = vcombine.high %v653, %v653
        %677 = vrot.lane.b32.xlu0 %v676, 96
        %v678 = vpop.permute.xlu0 %677
        %vm680 = vcmp.ge.s32.totalorder %v588, 96
        %vm681 = vcmp.lt.s32.totalorder %v588, 112
        %vm682 = vmand %vm680, %vm681
        %683 = vst.msk [vmem:[#allocation2] sm:$0x1] %vm682, %v678
        %v684 = vcombine.high %v668, %v668
        %685 = vrot.lane.b32.xlu0 %v684, 112
        %v686 = vpop.permute.xlu0 %685
        %vm688 = vcmp.ge.s32.totalorder %v588, 112
        %vm689 = vcmp.lt.s32.totalorder %v588, 128
        %vm690 = vmand %vm688, %vm689
        %691 = vst.msk [vmem:[#allocation2] sm:$0x1] %vm690, %v686
        %692 = vst.msk [vmem:[#allocation2 + $0x1] sm:$0x1] %vm591, %v585
        %v695 = vunpack.c.l.s4 1966171168
        %v696 = vunpack.c.0.s8 %v695
        %v697 = vlaneseq
        %v698 = vshrl.u32 %v697, 7
        %v699 = vsub.s32 %v696, %v698
        %v700 = vrot.slane %v585, %v699
        %v701 = vcombine.high %v700, %v700
        %v703 = vunpack.c.l.s4 1966171168
        %v704 = vunpack.c.0.s8 %v703
        %v705 = vlaneseq
        %v706 = vshrl.u32 %v705, 7
        %v707 = vsub.s32 %v704, %v706
        %v708 = vrot.slane %v700, %v707
        %v710 = vunpack.c.l.s4 1966171168
        %v711 = vunpack.c.0.s8 %v710
        %v712 = vlaneseq
        %v713 = vshrl.u32 %v712, 7
        %v714 = vsub.s32 %v711, %v713
        %v715 = vrot.slane %v701, %v714
        %716 = vrot.lane.b32.xlu0 %v715, 16
        %v717 = vpop.permute.xlu0 %716
        %719 = vst.msk [vmem:[#allocation2 + $0x1] sm:$0x1] %vm621, %v717
        %v720 = vcombine.high %v708, %v708
        %721 = vrot.lane.b32.xlu0 %v720, 32
        %v722 = vpop.permute.xlu0 %721
        %724 = vst.msk [vmem:[#allocation2 + $0x1] sm:$0x1] %vm629, %v722
        %v725 = vcombine.high %v715, %v715
        %726 = vrot.lane.b32.xlu0 %v725, 48
        %v727 = vpop.permute.xlu0 %726
        %729 = vst.msk [vmem:[#allocation2 + $0x1] sm:$0x1] %vm637, %v727
        %v730 = vcombine.high %v585, %v585
        %v732 = vunpack.c.l.s4 1966171168
        %v733 = vunpack.c.0.s8 %v732
        %v734 = vlaneseq
        %v735 = vshrl.u32 %v734, 7
        %v736 = vsub.s32 %v733, %v735
        %v737 = vrot.slane %v730, %v736
        %v739 = vunpack.c.l.s4 1966171168
        %v740 = vunpack.c.0.s8 %v739
        %v741 = vlaneseq
        %v742 = vshrl.u32 %v741, 7
        %v743 = vsub.s32 %v740, %v742
        %v744 = vrot.slane %v737, %v743
        %745 = vrot.lane.b32.xlu0 %v744, 64
        %v746 = vpop.permute.xlu0 %745
        %748 = vst.msk [vmem:[#allocation2 + $0x1] sm:$0x1] %vm659, %v746
        %v749 = vcombine.high %v737, %v737
        %v751 = vunpack.c.l.s4 1966171168
        %v752 = vunpack.c.0.s8 %v751
        %v753 = vlaneseq
        %v754 = vshrl.u32 %v753, 7
        %v755 = vsub.s32 %v752, %v754
        %v756 = vrot.slane %v749, %v755
        %757 = vrot.lane.b32.xlu0 %v756, 80
        %v758 = vpop.permute.xlu0 %757
        %760 = vst.msk [vmem:[#allocation2 + $0x1] sm:$0x1] %vm674, %v758
        %v761 = vcombine.high %v744, %v744
        %762 = vrot.lane.b32.xlu0 %v761, 96
        %v763 = vpop.permute.xlu0 %762
        %765 = vst.msk [vmem:[#allocation2 + $0x1] sm:$0x1] %vm682, %v763
        %v766 = vcombine.high %v756, %v756
        %767 = vrot.lane.b32.xlu0 %v766, 112
        %v768 = vpop.permute.xlu0 %767
        %770 = vst.msk [vmem:[#allocation2 + $0x1] sm:$0x1] %vm690, %v768
        %771 = vst.msk [vmem:[#allocation2 + $0x2] sm:$0x1] %vm591, %v586
        %v774 = vunpack.c.l.s4 1966171168
        %v775 = vunpack.c.0.s8 %v774
        %v776 = vlaneseq
        %v777 = vshrl.u32 %v776, 7
        %v778 = vsub.s32 %v775, %v777
        %v779 = vrot.slane %v586, %v778
        %v780 = vcombine.high %v779, %v779
        %v782 = vunpack.c.l.s4 1966171168
        %v783 = vunpack.c.0.s8 %v782
        %v784 = vlaneseq
        %v785 = vshrl.u32 %v784, 7
        %v786 = vsub.s32 %v783, %v785
        %v787 = vrot.slane %v779, %v786
        %v789 = vunpack.c.l.s4 1966171168
        %v790 = vunpack.c.0.s8 %v789
        %v791 = vlaneseq
        %v792 = vshrl.u32 %v791, 7
        %v793 = vsub.s32 %v790, %v792
        %v794 = vrot.slane %v780, %v793
        %795 = vrot.lane.b32.xlu0 %v794, 16
        %v796 = vpop.permute.xlu0 %795
        %798 = vst.msk [vmem:[#allocation2 + $0x2] sm:$0x1] %vm621, %v796
        %v799 = vcombine.high %v787, %v787
        %800 = vrot.lane.b32.xlu0 %v799, 32
        %v801 = vpop.permute.xlu0 %800
        %803 = vst.msk [vmem:[#allocation2 + $0x2] sm:$0x1] %vm629, %v801
        %v804 = vcombine.high %v794, %v794
        %805 = vrot.lane.b32.xlu0 %v804, 48
        %v806 = vpop.permute.xlu0 %805
        %808 = vst.msk [vmem:[#allocation2 + $0x2] sm:$0x1] %vm637, %v806
        %v809 = vcombine.high %v586, %v586
        %v811 = vunpack.c.l.s4 1966171168
        %v812 = vunpack.c.0.s8 %v811
        %v813 = vlaneseq
        %v814 = vshrl.u32 %v813, 7
        %v815 = vsub.s32 %v812, %v814
        %v816 = vrot.slane %v809, %v815
        %v818 = vunpack.c.l.s4 1966171168
        %v819 = vunpack.c.0.s8 %v818
        %v820 = vlaneseq
        %v821 = vshrl.u32 %v820, 7
        %v822 = vsub.s32 %v819, %v821
        %v823 = vrot.slane %v816, %v822
        %824 = vrot.lane.b32.xlu0 %v823, 64
        %v825 = vpop.permute.xlu0 %824
        %827 = vst.msk [vmem:[#allocation2 + $0x2] sm:$0x1] %vm659, %v825
        %v828 = vcombine.high %v816, %v816
        %v830 = vunpack.c.l.s4 1966171168
        %v831 = vunpack.c.0.s8 %v830
        %v832 = vlaneseq
        %v833 = vshrl.u32 %v832, 7
        %v834 = vsub.s32 %v831, %v833
        %v835 = vrot.slane %v828, %v834
        %836 = vrot.lane.b32.xlu0 %v835, 80
        %v837 = vpop.permute.xlu0 %836
        %839 = vst.msk [vmem:[#allocation2 + $0x2] sm:$0x1] %vm674, %v837
        %v840 = vcombine.high %v823, %v823
        %841 = vrot.lane.b32.xlu0 %v840, 96
        %v842 = vpop.permute.xlu0 %841
        %844 = vst.msk [vmem:[#allocation2 + $0x2] sm:$0x1] %vm682, %v842
        %v845 = vcombine.high %v835, %v835
        %846 = vrot.lane.b32.xlu0 %v845, 112
        %v847 = vpop.permute.xlu0 %846
        %849 = vst.msk [vmem:[#allocation2 + $0x2] sm:$0x1] %vm690, %v847
        %850 = vst.msk [vmem:[#allocation2 + $0x3] sm:$0x1] %vm591, %v587
        %v851 = vld [vmem:[#allocation2] sm:$0xf]
        %v853 = vlaneseq
        %v854 = vshrl.u32 %v853, 7
        %v855 = vsub.s32 0, %v854
        %v856 = vrot.slane %v851, %v855
        %v857 = vlaneseq
        %v858 = vshrl.u32 %v857, 7
        %v859 = vsub.s32 1, %v858
        %v860 = vrot.slane %v851, %v859
        %v861 = vlaneseq
        %v862 = vshrl.u32 %v861, 7
        %v863 = vsub.s32 2, %v862
        %v864 = vrot.slane %v851, %v863
        %v865 = vlaneseq
        %v866 = vshrl.u32 %v865, 7
        %v867 = vsub.s32 3, %v866
        %v868 = vrot.slane %v851, %v867
        %v873 = vpack.c.bf16 %v856, %v856
        %v874 = vpack.c.bf16 %v860, %v860
        %v875 = vpack.c.bf16 %v864, %v864
        %v876 = vpack.c.bf16 %v868, %v868
        %v877 = vld [vmem:[%s3] sm:$0xf]
        %v878 = vld [vmem:[%s3 + $0x4] sm:$0xf]
        %v879 = vld [vmem:[%s3 + $0x8] sm:$0xf]
        %v880 = vld [vmem:[%s3 + $0xc] sm:$0xf]
        %v881 = vld [vmem:[%s3 + $0x10] sm:$0xf]
        %v882 = vld [vmem:[%s3 + $0x14] sm:$0xf]
        %v883 = vld [vmem:[%s3 + $0x18] sm:$0xf]
        %v884 = vld [vmem:[%s3 + $0x1c] sm:$0xf]
        %v885 = vld [vmem:[%s3 + $0x20] sm:$0xf]
        %v886 = vld [vmem:[%s3 + $0x24] sm:$0xf]
        %v887 = vld [vmem:[%s3 + $0x28] sm:$0xf]
        %v888 = vld [vmem:[%s3 + $0x2c] sm:$0xf]
        %v889 = vld [vmem:[%s3 + $0x30] sm:$0xf]
        %v890 = vld [vmem:[%s3 + $0x34] sm:$0xf]
        %v891 = vld [vmem:[%s3 + $0x38] sm:$0xf]
        %v892 = vld [vmem:[%s3 + $0x3c] sm:$0xf]
        %v893 = vld [vmem:[%s3 + $0x40] sm:$0xf]
        %v894 = vld [vmem:[%s3 + $0x44] sm:$0xf]
        %v895 = vld [vmem:[%s3 + $0x48] sm:$0xf]
        %v896 = vld [vmem:[%s3 + $0x4c] sm:$0xf]
        %v897 = vld [vmem:[%s3 + $0x50] sm:$0xf]
        %v898 = vld [vmem:[%s3 + $0x54] sm:$0xf]
        %v899 = vld [vmem:[%s3 + $0x58] sm:$0xf]
        %v900 = vld [vmem:[%s3 + $0x5c] sm:$0xf]
        %v901 = vld [vmem:[%s3 + $0x60] sm:$0xf]
        %v902 = vld [vmem:[%s3 + $0x64] sm:$0xf]
        %v903 = vld [vmem:[%s3 + $0x68] sm:$0xf]
        %v904 = vld [vmem:[%s3 + $0x6c] sm:$0xf]
        %v905 = vld [vmem:[%s3 + $0x70] sm:$0xf]
        %v906 = vld [vmem:[%s3 + $0x74] sm:$0xf]
        %v907 = vld [vmem:[%s3 + $0x78] sm:$0xf]
        %v908 = vld [vmem:[%s3 + $0x7c] sm:$0xf]
        %v909 = vld [vmem:[%s3 + $0x80] sm:$0xf]
        %v910 = vld [vmem:[%s3 + $0x84] sm:$0xf]
        %v911 = vld [vmem:[%s3 + $0x88] sm:$0xf]
        %v912 = vld [vmem:[%s3 + $0x8c] sm:$0xf]
        %v913 = vld [vmem:[%s3 + $0x90] sm:$0xf]
        %v914 = vld [vmem:[%s3 + $0x94] sm:$0xf]
        %v915 = vld [vmem:[%s3 + $0x98] sm:$0xf]
        %v916 = vld [vmem:[%s3 + $0x9c] sm:$0xf]
        %v917 = vld [vmem:[%s3 + $0xa0] sm:$0xf]
        %v918 = vld [vmem:[%s3 + $0xa4] sm:$0xf]
        %v919 = vld [vmem:[%s3 + $0xa8] sm:$0xf]
        %v920 = vld [vmem:[%s3 + $0xac] sm:$0xf]
        %v921 = vld [vmem:[%s3 + $0xb0] sm:$0xf]
        %v922 = vld [vmem:[%s3 + $0xb4] sm:$0xf]
        %v923 = vld [vmem:[%s3 + $0xb8] sm:$0xf]
        %v924 = vld [vmem:[%s3 + $0xbc] sm:$0xf]
        %v925 = vld [vmem:[%s3 + $0xc0] sm:$0xf]
        %v926 = vld [vmem:[%s3 + $0xc4] sm:$0xf]
        %v927 = vld [vmem:[%s4] sm:$0x1]
        %v978 = vunpack.c.l.b16 %v877
        %v979 = vunpack.c.l.b16 %v878
        %v980 = vunpack.c.l.b16 %v879
        %v981 = vunpack.c.l.b16 %v880
        %v982 = vunpack.c.l.b16 %v881
        %v983 = vunpack.c.l.b16 %v882
        %v984 = vunpack.c.l.b16 %v883
        %v985 = vunpack.c.l.b16 %v884
        %v986 = vunpack.c.l.b16 %v885
        %v987 = vunpack.c.l.b16 %v886
        %v988 = vunpack.c.l.b16 %v887
        %v989 = vunpack.c.l.b16 %v888
        %v990 = vunpack.c.l.b16 %v889
        %v991 = vunpack.c.l.b16 %v890
        %v992 = vunpack.c.l.b16 %v891
        %v993 = vunpack.c.l.b16 %v892
        %v994 = vunpack.c.l.b16 %v893
        %v995 = vunpack.c.l.b16 %v894
        %v996 = vunpack.c.l.b16 %v895
        %v997 = vunpack.c.l.b16 %v896
        %v998 = vunpack.c.l.b16 %v897
        %v999 = vunpack.c.l.b16 %v898
        %v1000 = vunpack.c.l.b16 %v899
        %v1001 = vunpack.c.l.b16 %v900
        %v1002 = vunpack.c.l.b16 %v901
        %v1003 = vunpack.c.l.b16 %v902
        %v1004 = vunpack.c.l.b16 %v903
        %v1005 = vunpack.c.l.b16 %v904
        %v1006 = vunpack.c.l.b16 %v905
        %v1007 = vunpack.c.l.b16 %v906
        %v1008 = vunpack.c.l.b16 %v907
        %v1009 = vunpack.c.l.b16 %v908
        %v1010 = vunpack.c.l.b16 %v909
        %v1011 = vunpack.c.l.b16 %v910
        %v1012 = vunpack.c.l.b16 %v911
        %v1013 = vunpack.c.l.b16 %v912
        %v1014 = vunpack.c.l.b16 %v913
        %v1015 = vunpack.c.l.b16 %v914
        %v1016 = vunpack.c.l.b16 %v915
        %v1017 = vunpack.c.l.b16 %v916
        %v1018 = vunpack.c.l.b16 %v917
        %v1019 = vunpack.c.l.b16 %v918
        %v1020 = vunpack.c.l.b16 %v919
        %v1021 = vunpack.c.l.b16 %v920
        %v1022 = vunpack.c.l.b16 %v921
        %v1023 = vunpack.c.l.b16 %v922
        %v1024 = vunpack.c.l.b16 %v923
        %v1025 = vunpack.c.l.b16 %v924
        %v1026 = vunpack.c.l.b16 %v925
        %v1027 = vunpack.c.l.b16 %v926
        %v1028 = vpack.c.b16 %v979, %v978
        %v1029 = vpack.c.b16 %v981, %v980
        %v1030 = vpack.c.b16 %v983, %v982
        %v1031 = vpack.c.b16 %v985, %v984
        %v1032 = vpack.c.b16 %v987, %v986
        %v1033 = vpack.c.b16 %v989, %v988
        %v1034 = vpack.c.b16 %v991, %v990
        %v1035 = vpack.c.b16 %v993, %v992
        %v1036 = vpack.c.b16 %v995, %v994
        %v1037 = vpack.c.b16 %v997, %v996
        %v1038 = vpack.c.b16 %v999, %v998
        %v1039 = vpack.c.b16 %v1001, %v1000
        %v1040 = vpack.c.b16 %v1003, %v1002
        %v1041 = vpack.c.b16 %v1005, %v1004
        %v1042 = vpack.c.b16 %v1007, %v1006
        %v1043 = vpack.c.b16 %v1009, %v1008
        %v1044 = vpack.c.b16 %v1011, %v1010
        %v1045 = vpack.c.b16 %v1013, %v1012
        %v1046 = vpack.c.b16 %v1015, %v1014
        %v1047 = vpack.c.b16 %v1017, %v1016
        %v1048 = vpack.c.b16 %v1019, %v1018
        %v1049 = vpack.c.b16 %v1021, %v1020
        %v1050 = vpack.c.b16 %v1023, %v1022
        %v1051 = vpack.c.b16 %v1025, %v1024
        %v1052 = vpack.c.b16 %v1027, %v1026
        %vm1078 = vcmask 130048
        %v1080 = vsel %vm1078, %v876, 0
        %1082 = vmatprep.subr.bf16.mxu0 0
        %1083 = vmatpush1.bf16.msra.mxu0 %v1028
        %1084 = vmatprep.subr.bf16.mxu0 0
        %1085 = vmatpush1.bf16.msra.mxu0 %v1029
        %1086 = vmatprep.subr.bf16.mxu0 0
        %1087 = vmatpush1.bf16.msra.mxu0 %v1030
        %1088 = vmatprep.subr.bf16.mxu0 0
        %1089 = vmatpush1.bf16.msra.mxu0 %v1031
        %1090 = vmatprep.subr.bf16.mxu0 0
        %1091 = vmatpush1.bf16.msra.mxu0 %v1032
        %1092 = vmatprep.subr.bf16.mxu0 0
        %1093 = vmatpush1.bf16.msra.mxu0 %v1033
        %1094 = vmatprep.subr.bf16.mxu0 0
        %1095 = vmatpush1.bf16.msra.mxu0 %v1034
        %1096 = vmatprep.subr.bf16.mxu0 0
        %1097 = vmatpush1.bf16.msra.mxu0 %v1035
        %1098 = vmatprep.subr.bf16.mxu0 0
        %1099 = vmatpush1.bf16.msra.mxu0 %v1036
        %1100 = vmatprep.subr.bf16.mxu0 0
        %1101 = vmatpush1.bf16.msra.mxu0 %v1037
        %1102 = vmatprep.subr.bf16.mxu0 0
        %1103 = vmatpush1.bf16.msra.mxu0 %v1038
        %1104 = vmatprep.subr.bf16.mxu0 0
        %1105 = vmatpush1.bf16.msra.mxu0 %v1039
        %1106 = vmatprep.subr.bf16.mxu0 0
        %1107 = vmatpush1.bf16.msra.mxu0 %v1040
        %1108 = vmatprep.subr.bf16.mxu0 0
        %1109 = vmatpush1.bf16.msra.mxu0 %v1041
        %1110 = vmatprep.subr.bf16.mxu0 0
        %1111 = vmatpush1.bf16.msra.mxu0 %v1042
        %1112 = vmatprep.subr.bf16.mxu0 0
        %1113 = vmatpush1.bf16.msra.mxu0 %v1043
        %1114 = vmatprep.mubr.bf16.mxu0 %v874
        %1115 = vmatmul.mubr.bf16.gmra.mrb[0].mxu0 %v873
        %v1116 = vpop.f32.mrb[0].mxu0
        %v1117 = vadd.f32 %v927, %v1116
        %v1118 = vpop.f32.mrb[0].mxu0
        %v1119 = vpop.f32.mrb[0].mxu0
        %v1120 = vpop.f32.mrb[0].mxu0
        %1121 = vdwg.mxu0
        %1122 = vmatprep.subr.bf16.mxu0 0
        %1123 = vmatpush1.bf16.msra.mxu0 %v1044
        %1124 = vmatprep.subr.bf16.mxu0 0
        %1125 = vmatpush1.bf16.msra.mxu0 %v1045
        %1126 = vmatprep.subr.bf16.mxu0 0
        %1127 = vmatpush1.bf16.msra.mxu0 %v1046
        %1128 = vmatprep.subr.bf16.mxu0 0
        %1129 = vmatpush1.bf16.msra.mxu0 %v1047
        %1130 = vmatprep.subr.bf16.mxu0 0
        %1131 = vmatpush1.bf16.msra.mxu0 %v1048
        %1132 = vmatprep.subr.bf16.mxu0 0
        %1133 = vmatpush1.bf16.msra.mxu0 %v1049
        %1134 = vmatprep.subr.bf16.mxu0 0
        %1135 = vmatpush1.bf16.msra.mxu0 %v1050
        %1136 = vmatprep.subr.bf16.mxu0 0
        %1137 = vmatpush1.bf16.msra.mxu0 %v1051
        %1138 = vmatprep.subr.bf16.mxu0 0
        %1139 = vmatpush1.bf16.msra.mxu0 %v1052
        %1140 = vmatprep.subr.bf16.mxu0 0
        %1141 = vmatpush1.bf16.msra.mxu0 0
        %1142 = vmatprep.subr.bf16.mxu0 0
        %1143 = vmatpush1.bf16.msra.mxu0 0
        %1144 = vmatprep.subr.bf16.mxu0 0
        %1145 = vmatpush1.bf16.msra.mxu0 0
        %1146 = vmatprep.subr.bf16.mxu0 0
        %1147 = vmatpush1.bf16.msra.mxu0 0
        %1148 = vmatprep.subr.bf16.mxu0 0
        %1149 = vmatpush1.bf16.msra.mxu0 0
        %1150 = vmatprep.subr.bf16.mxu0 0
        %1151 = vmatpush1.bf16.msra.mxu0 0
        %1152 = vmatprep.subr.bf16.mxu0 0
        %1153 = vmatpush1.bf16.msra.mxu0 0
        %1154 = vmatprep.mubr.bf16.mxu0 %v1080
        %1155 = vmatmul.mubr.bf16.gmra.mrb[0].mxu0 %v875
        %v1156 = vpop.f32.mrb[0].mxu0
        %v1157 = vadd.f32 %v1117, %v1156
        %v1158 = vpop.f32.mrb[0].mxu0
        %v1159 = vpop.f32.mrb[0].mxu0
        %v1160 = vpop.f32.mrb[0].mxu0
        %1161 = vdwg.mxu0
        %v1162 = vmax.f32 %v1157, 0.0
        %v1163 = vpack.c.bf16 %v1162, %v1162
        %v1164 = vld [vmem:[%s5] sm:$0xf]
        %v1165 = vld [vmem:[%s5 + $0x4] sm:$0xf]
        %v1166 = vld [vmem:[%s5 + $0x8] sm:$0xf]
        %v1167 = vld [vmem:[%s5 + $0xc] sm:$0xf]
        %v1168 = vld [vmem:[%s5 + $0x10] sm:$0xf]
        %v1169 = vld [vmem:[%s5 + $0x14] sm:$0xf]
        %v1170 = vld [vmem:[%s5 + $0x18] sm:$0xf]
        %v1171 = vld [vmem:[%s5 + $0x1c] sm:$0xf]
        %v1172 = vld [vmem:[%s5 + $0x20] sm:$0xf]
        %v1173 = vld [vmem:[%s5 + $0x24] sm:$0xf]
        %v1174 = vld [vmem:[%s5 + $0x28] sm:$0xf]
        %v1175 = vld [vmem:[%s5 + $0x2c] sm:$0xf]
        %v1176 = vld [vmem:[%s5 + $0x30] sm:$0xf]
        %v1177 = vld [vmem:[%s5 + $0x34] sm:$0xf]
        %v1178 = vld [vmem:[%s5 + $0x38] sm:$0xf]
        %v1179 = vld [vmem:[%s5 + $0x3c] sm:$0xf]
        %v1180 = vld [vmem:[%s6] sm:$0x1]
        %v1197 = vunpack.c.l.b16 %v1164
        %v1198 = vunpack.c.l.b16 %v1165
        %v1199 = vunpack.c.l.b16 %v1166
        %v1200 = vunpack.c.l.b16 %v1167
        %v1201 = vunpack.c.l.b16 %v1168
        %v1202 = vunpack.c.l.b16 %v1169
        %v1203 = vunpack.c.l.b16 %v1170
        %v1204 = vunpack.c.l.b16 %v1171
        %v1205 = vunpack.c.l.b16 %v1172
        %v1206 = vunpack.c.l.b16 %v1173
        %v1207 = vunpack.c.l.b16 %v1174
        %v1208 = vunpack.c.l.b16 %v1175
        %v1209 = vunpack.c.l.b16 %v1176
        %v1210 = vunpack.c.l.b16 %v1177
        %v1211 = vunpack.c.l.b16 %v1178
        %v1212 = vunpack.c.l.b16 %v1179
        %v1213 = vpack.c.b16 %v1198, %v1197
        %v1214 = vpack.c.b16 %v1200, %v1199
        %v1215 = vpack.c.b16 %v1202, %v1201
        %v1216 = vpack.c.b16 %v1204, %v1203
        %v1217 = vpack.c.b16 %v1206, %v1205
        %v1218 = vpack.c.b16 %v1208, %v1207
        %v1219 = vpack.c.b16 %v1210, %v1209
        %v1220 = vpack.c.b16 %v1212, %v1211
        %1229 = vmatprep.subr.bf16.mxu0 0
        %1230 = vmatpush1.bf16.msra.mxu0 %v1213
        %1231 = vmatprep.subr.bf16.mxu0 0
        %1232 = vmatpush1.bf16.msra.mxu0 %v1214
        %1233 = vmatprep.subr.bf16.mxu0 0
        %1234 = vmatpush1.bf16.msra.mxu0 %v1215
        %1235 = vmatprep.subr.bf16.mxu0 0
        %1236 = vmatpush1.bf16.msra.mxu0 %v1216
        %1237 = vmatprep.subr.bf16.mxu0 0
        %1238 = vmatpush1.bf16.msra.mxu0 %v1217
        %1239 = vmatprep.subr.bf16.mxu0 0
        %1240 = vmatpush1.bf16.msra.mxu0 %v1218
        %1241 = vmatprep.subr.bf16.mxu0 0
        %1242 = vmatpush1.bf16.msra.mxu0 %v1219
        %1243 = vmatprep.subr.bf16.mxu0 0
        %1244 = vmatpush1.bf16.msra.mxu0 %v1220
        %1245 = vmatprep.subr.bf16.mxu0 0
        %1246 = vmatpush1.bf16.msra.mxu0 0
        %1247 = vmatprep.subr.bf16.mxu0 0
        %1248 = vmatpush1.bf16.msra.mxu0 0
        %1249 = vmatprep.subr.bf16.mxu0 0
        %1250 = vmatpush1.bf16.msra.mxu0 0
        %1251 = vmatprep.subr.bf16.mxu0 0
        %1252 = vmatpush1.bf16.msra.mxu0 0
        %1253 = vmatprep.subr.bf16.mxu0 0
        %1254 = vmatpush1.bf16.msra.mxu0 0
        %1255 = vmatprep.subr.bf16.mxu0 0
        %1256 = vmatpush1.bf16.msra.mxu0 0
        %1257 = vmatprep.subr.bf16.mxu0 0
        %1258 = vmatpush1.bf16.msra.mxu0 0
        %1259 = vmatprep.subr.bf16.mxu0 0
        %1260 = vmatpush1.bf16.msra.mxu0 0
        %1261 = vmatprep.mubr.bf16.mxu0 0
        %1262 = vmatmul.mubr.bf16.gmra.mrb[0].mxu0 %v1163
        %v1263 = vpop.f32.mrb[0].mxu0
        %v1264 = vadd.f32 %v1180, %v1263
        %v1265 = vpop.f32.mrb[0].mxu0
        %v1266 = vpop.f32.mrb[0].mxu0
        %v1267 = vpop.f32.mrb[0].mxu0
        %1268 = vdwg.mxu0
        %v1269 = vmax.f32 %v1264, 0.0
        %v1270 = vpack.c.bf16 %v1269, %v1269
        %v1271 = vld [vmem:[%s7] sm:$0xf]
        %v1272 = vld [vmem:[%s7 + $0x4] sm:$0xf]
        %v1273 = vld [vmem:[%s7 + $0x8] sm:$0xf]
        %v1274 = vld [vmem:[%s7 + $0xc] sm:$0xf]
        %v1275 = vld [vmem:[%s7 + $0x10] sm:$0xf]
        %v1276 = vld [vmem:[%s7 + $0x14] sm:$0xf]
        %v1277 = vld [vmem:[%s7 + $0x18] sm:$0xf]
        %v1278 = vld [vmem:[%s7 + $0x1c] sm:$0xf]
        %v1279 = vld [vmem:[%s7 + $0x20] sm:$0xf]
        %v1280 = vld [vmem:[%s7 + $0x24] sm:$0xf]
        %v1281 = vld [vmem:[%s7 + $0x28] sm:$0xf]
        %v1282 = vld [vmem:[%s7 + $0x2c] sm:$0xf]
        %v1283 = vld [vmem:[%s7 + $0x30] sm:$0xf]
        %v1284 = vld [vmem:[%s7 + $0x34] sm:$0xf]
        %v1285 = vld [vmem:[%s7 + $0x38] sm:$0xf]
        %v1286 = vld [vmem:[%s7 + $0x3c] sm:$0xf]
        %v1287 = vld [vmem:[%s8] sm:$0x1]
        %v1304 = vunpack.c.l.b16 %v1271
        %v1305 = vunpack.c.l.b16 %v1272
        %v1306 = vunpack.c.l.b16 %v1273
        %v1307 = vunpack.c.l.b16 %v1274
        %v1308 = vunpack.c.l.b16 %v1275
        %v1309 = vunpack.c.l.b16 %v1276
        %v1310 = vunpack.c.l.b16 %v1277
        %v1311 = vunpack.c.l.b16 %v1278
        %v1312 = vunpack.c.l.b16 %v1279
        %v1313 = vunpack.c.l.b16 %v1280
        %v1314 = vunpack.c.l.b16 %v1281
        %v1315 = vunpack.c.l.b16 %v1282
        %v1316 = vunpack.c.l.b16 %v1283
        %v1317 = vunpack.c.l.b16 %v1284
        %v1318 = vunpack.c.l.b16 %v1285
        %v1319 = vunpack.c.l.b16 %v1286
        %v1320 = vpack.c.b16 %v1305, %v1304
        %v1321 = vpack.c.b16 %v1307, %v1306
        %v1322 = vpack.c.b16 %v1309, %v1308
        %v1323 = vpack.c.b16 %v1311, %v1310
        %v1324 = vpack.c.b16 %v1313, %v1312
        %v1325 = vpack.c.b16 %v1315, %v1314
        %v1326 = vpack.c.b16 %v1317, %v1316
        %v1327 = vpack.c.b16 %v1319, %v1318
        %1336 = vmatprep.subr.bf16.mxu0 0
        %1337 = vmatpush1.bf16.msra.mxu0 %v1320
        %1338 = vmatprep.subr.bf16.mxu0 0
        %1339 = vmatpush1.bf16.msra.mxu0 %v1321
        %1340 = vmatprep.subr.bf16.mxu0 0
        %1341 = vmatpush1.bf16.msra.mxu0 %v1322
        %1342 = vmatprep.subr.bf16.mxu0 0
        %1343 = vmatpush1.bf16.msra.mxu0 %v1323
        %1344 = vmatprep.subr.bf16.mxu0 0
        %1345 = vmatpush1.bf16.msra.mxu0 %v1324
        %1346 = vmatprep.subr.bf16.mxu0 0
        %1347 = vmatpush1.bf16.msra.mxu0 %v1325
        %1348 = vmatprep.subr.bf16.mxu0 0
        %1349 = vmatpush1.bf16.msra.mxu0 %v1326
        %1350 = vmatprep.subr.bf16.mxu0 0
        %1351 = vmatpush1.bf16.msra.mxu0 %v1327
        %1352 = vmatprep.subr.bf16.mxu0 0
        %1353 = vmatpush1.bf16.msra.mxu0 0
        %1354 = vmatprep.subr.bf16.mxu0 0
        %1355 = vmatpush1.bf16.msra.mxu0 0
        %1356 = vmatprep.subr.bf16.mxu0 0
        %1357 = vmatpush1.bf16.msra.mxu0 0
        %1358 = vmatprep.subr.bf16.mxu0 0
        %1359 = vmatpush1.bf16.msra.mxu0 0
        %1360 = vmatprep.subr.bf16.mxu0 0
        %1361 = vmatpush1.bf16.msra.mxu0 0
        %1362 = vmatprep.subr.bf16.mxu0 0
        %1363 = vmatpush1.bf16.msra.mxu0 0
        %1364 = vmatprep.subr.bf16.mxu0 0
        %1365 = vmatpush1.bf16.msra.mxu0 0
        %1366 = vmatprep.subr.bf16.mxu0 0
        %1367 = vmatpush1.bf16.msra.mxu0 0
        %1368 = vmatprep.mubr.bf16.mxu0 0
        %1369 = vmatmul.mubr.bf16.gmra.mrb[0].mxu0 %v1270
        %v1370 = vpop.f32.mrb[0].mxu0
        %v1371 = vadd.f32 %v1287, %v1370
        %v1372 = vpop.f32.mrb[0].mxu0
        %v1373 = vpop.f32.mrb[0].mxu0
        %v1374 = vpop.f32.mrb[0].mxu0
        %1375 = vdwg.mxu0
        %1376 = vst [vmem:[%s324] sm:$0x1] %v1371
        %s1377 = sand.u32 %s225, 1
        %s1378 = scalar_lea.sflag [#allocation4], %s1377
        %s1379 = sand.u32 %s225, 1
        %s1380 = scalar_lea.vmem [#allocation3], %s1379
        // Predicated region
        $region57: #{net_forward.3} parent=55 // pred_check
          %p1381 = pneg %p235
        $region58: #{net_forward.3} parent=55 // pred_check_branch
          %1383 = sbr.rel (%p1381) target = $region60
        $region59: #{net_forward.3} parent=55 // pred_region
          %s1385 = ssub.s32 16, 16
          %1386 = vsyncadd %s1378, %s1385
          %s1387 = smul.addr %s23, 16
          %s1388 = scalar_lea.hbm %s9, %s1387
          %s1390 = sshll.u32 %s1380, 4
          %s1391 = int_to_ptr.vmem [resolvable:$true] %s1390
          %1393 = dma.vmem_to_hbm [thread:$0]  %s1391, 16, %s1388, %s1378
        $region60: #{net_forward.3} parent=55 // pred_fallthru
          _
      $region56: #{net_forward.3} parent=5 // pred_fallthru
        _
      %p1394 = scmp.le.s32.totalorder 2, %s18
      // Predicated region
      $region61: #{net_forward.3} parent=5 // pred_check
        %p1395 = pneg %p1394
      $region62: #{net_forward.3} parent=5 // pred_check_branch
        %1397 = sbr.rel (%p1395) target = $region64
      $region63: #{net_forward.3} parent=5 // pred_region
        %s1398 = ssub.s32 %s18, 2
        // Predicated region
        $region65: #{net_forward.3} parent=63 // pred_check
          %p1399 = pneg %p241
        $region66: #{net_forward.3} parent=63 // pred_check_branch
          %1401 = sbr.rel (%p1399) target = $region68
        $region67: #{net_forward.3} parent=63 // pred_region
          %s1402 = sand.u32 %s226, 1
          %s1403 = scalar_lea.sflag [#allocation4], %s1402
          %s1404 = sand.u32 %s226, 1
          %s1405 = scalar_lea.vmem [#allocation3], %s1404
          %1406 = dma.done %s1403, 16
        $region68: #{net_forward.3} parent=63 // pred_fallthru
          _
      $region64: #{net_forward.3} parent=5 // pred_fallthru
        _
    $region6: #{net_forward.3} parent=1 // loop_footer
      %s22 = sadd.s32 1, %s18
    $region7: #{net_forward.3} parent=1 // loop_footer_branch
      %17 = sbr.rel target = $region3
    $region8: #{net_forward.3} parent=1 // loop_exit
      _
    %1407 = vsyncpa [#allocation4], 1
    %s1408 = scalar_lea.sflag [#allocation4], 1
    %1409 = vsyncpa %s1408, 1

</llo_original>
